<compile_context>
chip_gen: v5e
topology: v5e:2x2
jax: 0.10.0
libtpu: 0.0.40
codegen_flags: <defaults>
</compile_context>

<pallas_src>
import math
import numpy as np
import jax
import jax.numpy as jnp
from jax.experimental import pallas as pl
from jax.experimental.pallas import tpu as pltpu


def make_graph_rnn_kernel(F, Bp, H):
    G = 4 * H  # per-direction gate width (== 128 lanes for H=32)

    def kernel(x_ref, fc1w_ref, fc1b_ref,
               wih_ref, bg_ref, whh_ref,
               fc2wf_ref, fc2wb_ref, fc2b_ref,
               attb_ref, gbias_ref,
               fcgw_ref, fcgb_ref, bias_ref,
               out_ref,
               hf_ref, hb_ref):
        # ---- batched input projection over all frames: one (F*Bp, In_pad)@(In_pad, H) ----
        z = jnp.tanh(jnp.dot(x_ref[...], fc1w_ref[...],
                             preferred_element_type=jnp.float32) + fc1b_ref[...])

        # ---- fused cuDNN-style split: ONE matmul gives both directions' input-gate
        #      contributions; biases folded in so nothing is re-broadcast per step ----
        gx = jnp.dot(z, wih_ref[...], preferred_element_type=jnp.float32) + bg_ref[...]
        whh = whh_ref[...]  # (H, 8H) = [whh_f | whh_b]

        # Lane-constant scale (hoisted, full tile so no per-iter broadcast):
        # multiply the g-gate lane block by 2 so a SINGLE sigmoid pass also yields
        # tanh(g) via tanh(x) = 2*sigmoid(2x) - 1.
        lane = jax.lax.broadcasted_iota(jnp.int32, (2 * Bp, G), 1)
        g_scale = jnp.where((lane >= 2 * H) & (lane < 3 * H), 2.0, 1.0).astype(jnp.float32)

        # ---- fused bidirectional recurrence (statically unrolled, static offsets) ----
        # rows 0:Bp of h/c = forward direction (frame s), rows Bp:2Bp = backward (frame F-1-s)
        h = jnp.zeros((2 * Bp, H), jnp.float32)
        c = jnp.zeros((2 * Bp, H), jnp.float32)
        for s in range(F):
            tb = F - 1 - s
            gh = jnp.dot(h, whh, preferred_element_type=jnp.float32)      # (2Bp, 8H)
            # keep only the diagonal blocks (vreg-aligned slices)
            gates_f = gx[s * Bp:(s + 1) * Bp, 0:G] + gh[0:Bp, 0:G]
            gates_b = gx[tb * Bp:(tb + 1) * Bp, G:2 * G] + gh[Bp:2 * Bp, G:2 * G]
            gates = jnp.concatenate([gates_f, gates_b], axis=0)           # (2Bp, 4H)
            sg = jax.nn.sigmoid(gates * g_scale)                           # single EUP pass
            # PyTorch gate order: i, f, g, o
            i = sg[:, 0:H]
            f = sg[:, H:2 * H]
            g = 2.0 * sg[:, 2 * H:3 * H] - 1.0                             # == tanh(g_raw)
            o = sg[:, 3 * H:4 * H]
            c = f * c + i * g
            h = o * jnp.tanh(c)
            hf_ref[s * Bp:(s + 1) * Bp, :] = h[0:Bp, :]
            hb_ref[tb * Bp:(tb + 1) * Bp, :] = h[Bp:2 * Bp, :]

        # ---- batched, lane-dense output head over the whole (F*Bp, .) slab ----
        hf = hf_ref[...]
        hb = hb_ref[...]
        # fc2 over concat(h_fwd, h_bwd) == split matmul (avoids in-kernel lane concat)
        y1 = jnp.tanh(jnp.dot(hf, fc2wf_ref[...], preferred_element_type=jnp.float32)
                      + jnp.dot(hb, fc2wb_ref[...], preferred_element_type=jnp.float32)
                      + fc2b_ref[...])
        # GraphLinear: matmul with kron(att, I_dim), zero-padded to 128 lanes
        g2 = jnp.dot(y1, attb_ref[...], preferred_element_type=jnp.float32)
        y2 = jnp.tanh(jnp.tanh(g2) + gbias_ref[...])   # dropout == identity (inference)
        out_ref[...] = (jnp.tanh(jnp.dot(y2, fcgw_ref[...], preferred_element_type=jnp.float32)
                                 + fcgb_ref[...])
                        + bias_ref[...])

    return kernel


def graph_rnn_forward(x, kp, out_dim):
    """x: (frame, batch, input_node*dim). Returns (frame, batch, out_node*dim)."""
    F, B, In = x.shape
    In_pad, H = kp["fc1w"].shape
    Dout_pad = kp["bias"].shape[1]
    Bp = max(8, ((B + 7) // 8) * 8)          # pad batch to a full sublane group

    xp = jnp.pad(x, ((0, 0), (0, Bp - B), (0, In_pad - In))).reshape(F * Bp, In_pad)

    args = (xp,
            kp["fc1w"], kp["fc1b"],
            kp["wih_comb"], kp["b_comb"], kp["whh_wide"],
            kp["fc2wf"], kp["fc2wb"], kp["fc2b"],
            kp["att_big"], kp["gbias"],
            kp["fcgw"], kp["fcgb"], kp["bias"])
    vmem = pl.BlockSpec(memory_space=pltpu.MemorySpace.VMEM)
    out2d = pl.pallas_call(
        make_graph_rnn_kernel(F, Bp, H),
        out_shape=jax.ShapeDtypeStruct((F * Bp, Dout_pad), jnp.float32),
        in_specs=[vmem] * len(args),
        out_specs=vmem,
        scratch_shapes=[pltpu.VMEM((F * Bp, H), jnp.float32),   # forward hidden states
                        pltpu.VMEM((F * Bp, H), jnp.float32)],  # backward hidden states
    )(*args)
    return out2d.reshape(F, Bp, Dout_pad)[:, :B, :out_dim]


def init_params(key, input_node, out_node, dim, hidden):
    In = input_node * dim
    Dout = out_node * dim
    H = hidden
    In_pad = ((In + 127) // 128) * 128
    Dout_pad = ((Dout + 127) // 128) * 128
    keys = jax.random.split(key, 16)

    def xavier(k, out_f, in_f):
        std = math.sqrt(2.0 / (in_f + out_f))
        return std * jax.random.normal(k, (out_f, in_f), jnp.float32)

    # BiLSTM.fc1 : Linear(In -> H), xavier_normal weight, bias = 0.1
    fc1_w = xavier(keys[0], H, In)
    fc1_b = jnp.full((H,), 0.1, jnp.float32)

    # bidirectional LSTM (num_layers=1), PyTorch default uniform(-1/sqrt(H), 1/sqrt(H))
    k_l = 1.0 / math.sqrt(H)

    def uni(k, shape):
        return jax.random.uniform(k, shape, jnp.float32, -k_l, k_l)

    wih_f = uni(keys[1], (4 * H, H)); whh_f = uni(keys[2], (4 * H, H))
    bih_f = uni(keys[3], (4 * H,));   bhh_f = uni(keys[4], (4 * H,))
    wih_b = uni(keys[5], (4 * H, H)); whh_b = uni(keys[6], (4 * H, H))
    bih_b = uni(keys[7], (4 * H,));   bhh_b = uni(keys[8], (4 * H,))

    # BiLSTM.fc2 : Linear(2H -> Dout)
    fc2_w = xavier(keys[9], Dout, 2 * H)
    fc2_b = jnp.full((Dout,), 0.1, jnp.float32)

    # GraphLinear on out_node nodes: att = normalized Laplacian of (Adj*M + Q)
    N = out_node
    adj_np = np.zeros((N, N), np.float32)
    for i in range(N):
        adj_np[i, (i + 1) % N] = 1.0
        adj_np[(i + 1) % N, i] = 1.0
    adj = jnp.asarray(adj_np)
    Q = jax.random.uniform(keys[10], (N, N), jnp.float32, 0.01, 0.24)
    A = adj * adj + Q                       # Adj * M + Q  (M == adj)
    d = jnp.sum(A, axis=-1) ** (-0.5)
    D = jnp.diag(d)
    att = jnp.eye(N, dtype=jnp.float32) - D @ A @ D
    att_big = jnp.kron(att, jnp.eye(dim, dtype=jnp.float32))   # (Dout, Dout)
    stdv_g = 1.0 / math.sqrt(N * 9)
    gbias = jax.random.uniform(keys[11], (Dout,), jnp.float32, -stdv_g, stdv_g)

    # Graph_RNN.fc1 : Linear(Dout -> Dout)
    fcg_w = xavier(keys[12], Dout, Dout)
    fcg_b = jnp.full((Dout,), 0.1, jnp.float32)

    # Graph_RNN.bias
    stdv = 1.0 / math.sqrt(out_node * 3)
    bias = jax.random.uniform(keys[13], (Dout,), jnp.float32, -stdv, stdv)

    # ---- unpadded, un-fused params (used by the numpy reference) ----
    ref = dict(
        fc1w=fc1_w.T, fc1b=fc1_b.reshape(1, H),
        wih_f=wih_f.T, whh_f=whh_f.T, b_f=(bih_f + bhh_f).reshape(1, 4 * H),
        wih_b=wih_b.T, whh_b=whh_b.T, b_b=(bih_b + bhh_b).reshape(1, 4 * H),
        fc2wf=fc2_w[:, :H].T, fc2wb=fc2_w[:, H:].T, fc2b=fc2_b.reshape(1, Dout),
        gbias=gbias.reshape(1, Dout),
        fcgw=fcg_w.T, fcgb=fcg_b.reshape(1, Dout),
        bias=bias.reshape(1, Dout),
    )

    # ---- kernel params: fused direction weights + lane-dense (zero-padded) head ----
    def pad_cols(a, cols):
        return jnp.pad(a, ((0, 0), (0, cols - a.shape[1])))

    kparams = dict(
        fc1w=jnp.pad(ref["fc1w"], ((0, In_pad - In), (0, 0))),          # (In_pad, H)
        fc1b=ref["fc1b"],
        wih_comb=jnp.concatenate([ref["wih_f"], ref["wih_b"]], axis=1),  # (H, 8H)
        b_comb=jnp.concatenate([ref["b_f"], ref["b_b"]], axis=1),        # (1, 8H)
        whh_wide=jnp.concatenate([ref["whh_f"], ref["whh_b"]], axis=1),  # (H, 8H)
        fc2wf=pad_cols(ref["fc2wf"], Dout_pad),
        fc2wb=pad_cols(ref["fc2wb"], Dout_pad),
        fc2b=pad_cols(ref["fc2b"], Dout_pad),
        att_big=jnp.pad(att_big, ((0, Dout_pad - Dout), (0, Dout_pad - Dout))),
        gbias=pad_cols(ref["gbias"], Dout_pad),
        fcgw=jnp.pad(ref["fcgw"], ((0, Dout_pad - Dout), (0, Dout_pad - Dout))),
        fcgb=pad_cols(ref["fcgb"], Dout_pad),
        bias=pad_cols(ref["bias"], Dout_pad),
    )
    return kparams, ref, att


def reference_forward(x, p, att, out_node, dim):
    """Pure numpy reference following the original PyTorch reshape/transpose path."""
    x = np.asarray(x)
    p = {k: np.asarray(v) for k, v in p.items()}
    att = np.asarray(att)
    F, B, _ = x.shape
    H = p["fc1w"].shape[1]
    N = out_node

    z = np.tanh(x @ p["fc1w"] + p["fc1b"])   # (F, B, H)

    def cell(z_t, h, c, wih, whh, b):
        gates = z_t @ wih + h @ whh + b
        i = 1.0 / (1.0 + np.exp(-gates[:, :H]))
        f = 1.0 / (1.0 + np.exp(-gates[:, H:2 * H]))
        g = np.tanh(gates[:, 2 * H:3 * H])
        o = 1.0 / (1.0 + np.exp(-gates[:, 3 * H:4 * H]))
        c = f * c + i * g
        h = o * np.tanh(c)
        return h, c

    hf = np.zeros((F, B, H), np.float32)
    h = np.zeros((B, H), np.float32); c = np.zeros((B, H), np.float32)
    for t in range(F):
        h, c = cell(z[t], h, c, p["wih_f"], p["whh_f"], p["b_f"])
        hf[t] = h
    hb = np.zeros((F, B, H), np.float32)
    h = np.zeros((B, H), np.float32); c = np.zeros((B, H), np.float32)
    for s in range(F):
        t = F - 1 - s
        h, c = cell(z[t], h, c, p["wih_b"], p["whh_b"], p["b_b"])
        hb[t] = h

    y1 = np.tanh(hf @ p["fc2wf"] + hb @ p["fc2wb"] + p["fc2b"])      # (F, B, N*dim)
    xyz = y1.reshape(F, B, N, dim).transpose(0, 1, 3, 2)             # (F, B, dim, N)
    g = xyz @ att                                                    # (F, B, dim, N)
    g = g.transpose(0, 1, 3, 2).reshape(F, B, N * dim)
    graphxyz = np.tanh(g) + p["gbias"]
    y2 = np.tanh(graphxyz)
    return np.tanh(y2 @ p["fcgw"] + p["fcgb"]) + p["bias"]


if __name__ == "__main__":
    frame, batch = 8, 2
    input_node, out_node, dim, hidden = 5, 5, 3, 32

    key = jax.random.PRNGKey(0)
    kx, kp = jax.random.split(key)
    x = jax.random.normal(kx, (frame, batch, input_node * dim), jnp.float32)
    kparams, ref_params, att = init_params(kp, input_node, out_node, dim, hidden)

    out = graph_rnn_forward(x, kparams, out_node * dim)
    out = jax.block_until_ready(out)

    ref = reference_forward(x, ref_params, att, out_node, dim)
    assert out.shape == (frame, batch, out_node * dim)
    out_np = np.asarray(out)
    assert np.isfinite(out_np).all()
    max_err = float(np.max(np.abs(out_np - ref)))
    assert max_err < 1e-3, f"max abs err {max_err}"
    print("KERNEL_OK")
</pallas_src>

<mosaic_0001>
module attributes {stable_mosaic.version = 11 : i64} {
  func.func @kernel(%arg0: memref<64x128xf32, #tpu.memory_space<vmem>>, %arg1: memref<128x32xf32, #tpu.memory_space<vmem>>, %arg2: memref<1x32xf32, #tpu.memory_space<vmem>>, %arg3: memref<32x256xf32, #tpu.memory_space<vmem>>, %arg4: memref<1x256xf32, #tpu.memory_space<vmem>>, %arg5: memref<32x256xf32, #tpu.memory_space<vmem>>, %arg6: memref<32x128xf32, #tpu.memory_space<vmem>>, %arg7: memref<32x128xf32, #tpu.memory_space<vmem>>, %arg8: memref<1x128xf32, #tpu.memory_space<vmem>>, %arg9: memref<128x128xf32, #tpu.memory_space<vmem>>, %arg10: memref<1x128xf32, #tpu.memory_space<vmem>>, %arg11: memref<128x128xf32, #tpu.memory_space<vmem>>, %arg12: memref<1x128xf32, #tpu.memory_space<vmem>>, %arg13: memref<1x128xf32, #tpu.memory_space<vmem>>, %arg14: memref<64x128xf32, #tpu.memory_space<vmem>>, %arg15: memref<64x32xf32, #tpu.memory_space<vmem>>, %arg16: memref<64x32xf32, #tpu.memory_space<vmem>>) attributes {dimension_semantics = [], scalar_prefetch = 0 : i64, scratch_operands = 2 : i64, tpu.core_type = #tpu.core_type<tc>} {
    %c0 = arith.constant 0 : index
    %c0_0 = arith.constant 0 : index
    %0 = vector.load %arg0[%c0, %c0_0] : memref<64x128xf32, #tpu.memory_space<vmem>>, vector<64x128xf32>
    %c0_1 = arith.constant 0 : index
    %c0_2 = arith.constant 0 : index
    %1 = vector.load %arg1[%c0_1, %c0_2] : memref<128x32xf32, #tpu.memory_space<vmem>>, vector<128x32xf32>
    %cst = arith.constant dense<0.000000e+00> : vector<64x32xf32>
    %2 = tpu.matmul %0, %1, %cst {dimension_numbers = #tpu.dot_dimension_numbers<[1], [0], [0], [1], [0, 0, 1, 1], [], []>} : vector<64x128xf32>, vector<128x32xf32>, vector<64x32xf32> -> vector<64x32xf32>
    %c0_3 = arith.constant 0 : index
    %c0_4 = arith.constant 0 : index
    %3 = vector.load %arg2[%c0_3, %c0_4] : memref<1x32xf32, #tpu.memory_space<vmem>>, vector<1x32xf32>
    %4 = vector.broadcast %3 : vector<1x32xf32> to vector<64x32xf32>
    %5 = arith.addf %2, %4 : vector<64x32xf32>
    %6 = math.tanh %5 : vector<64x32xf32>
    %c0_5 = arith.constant 0 : index
    %c0_6 = arith.constant 0 : index
    %7 = vector.load %arg3[%c0_5, %c0_6] : memref<32x256xf32, #tpu.memory_space<vmem>>, vector<32x256xf32>
    %cst_7 = arith.constant dense<0.000000e+00> : vector<64x256xf32>
    %8 = tpu.matmul %6, %7, %cst_7 {dimension_numbers = #tpu.dot_dimension_numbers<[1], [0], [0], [1], [0, 0, 1, 1], [], []>} : vector<64x32xf32>, vector<32x256xf32>, vector<64x256xf32> -> vector<64x256xf32>
    %c0_8 = arith.constant 0 : index
    %c0_9 = arith.constant 0 : index
    %9 = vector.load %arg4[%c0_8, %c0_9] : memref<1x256xf32, #tpu.memory_space<vmem>>, vector<1x256xf32>
    %10 = vector.broadcast %9 : vector<1x256xf32> to vector<64x256xf32>
    %11 = arith.addf %8, %10 : vector<64x256xf32>
    %c0_10 = arith.constant 0 : index
    %c0_11 = arith.constant 0 : index
    %12 = vector.load %arg5[%c0_10, %c0_11] : memref<32x256xf32, #tpu.memory_space<vmem>>, vector<32x256xf32>
    %13 = tpu.iota {dimensions = array<i32: 1>} : vector<16x128xi32>
    %c64_i32 = arith.constant 64 : i32
    %14 = vector.broadcast %c64_i32 : i32 to vector<16x128xi32>
    %15 = arith.cmpi sge, %13, %14 : vector<16x128xi32>
    %c96_i32 = arith.constant 96 : i32
    %16 = vector.broadcast %c96_i32 : i32 to vector<16x128xi32>
    %17 = arith.cmpi slt, %13, %16 : vector<16x128xi32>
    %18 = arith.andi %15, %17 : vector<16x128xi1>
    %cst_12 = arith.constant 2.000000e+00 : f32
    %cst_13 = arith.constant 1.000000e+00 : f32
    %19 = vector.broadcast %cst_12 : f32 to vector<16x128xf32>
    %20 = vector.broadcast %cst_13 : f32 to vector<16x128xf32>
    %21 = arith.select %18, %19, %20 : vector<16x128xi1>, vector<16x128xf32>
    %cst_14 = arith.constant 0.000000e+00 : f32
    %22 = vector.broadcast %cst_14 : f32 to vector<16x32xf32>
    %cst_15 = arith.constant 0.000000e+00 : f32
    %23 = vector.broadcast %cst_15 : f32 to vector<16x32xf32>
    %cst_16 = arith.constant dense<0.000000e+00> : vector<16x256xf32>
    %24 = tpu.matmul %22, %12, %cst_16 {dimension_numbers = #tpu.dot_dimension_numbers<[1], [0], [0], [1], [0, 0, 1, 1], [], []>} : vector<16x32xf32>, vector<32x256xf32>, vector<16x256xf32> -> vector<16x256xf32>
    %25 = vector.extract_strided_slice %11 {offsets = [0, 0], sizes = [8, 128], strides = [1, 1]} : vector<64x256xf32> to vector<8x128xf32>
    %26 = vector.extract_strided_slice %24 {offsets = [0, 0], sizes = [8, 128], strides = [1, 1]} : vector<16x256xf32> to vector<8x128xf32>
    %27 = arith.addf %25, %26 : vector<8x128xf32>
    %28 = vector.extract_strided_slice %11 {offsets = [56, 128], sizes = [8, 128], strides = [1, 1]} : vector<64x256xf32> to vector<8x128xf32>
    %29 = vector.extract_strided_slice %24 {offsets = [8, 128], sizes = [8, 128], strides = [1, 1]} : vector<16x256xf32> to vector<8x128xf32>
    %30 = arith.addf %28, %29 : vector<8x128xf32>
    %31 = tpu.concatenate %27, %30 in 0 : vector<8x128xf32>, vector<8x128xf32> -> vector<16x128xf32>
    %32 = arith.mulf %31, %21 : vector<16x128xf32>
    %33 = arith.negf %32 : vector<16x128xf32>
    %34 = math.exp %33 : vector<16x128xf32>
    %cst_17 = arith.constant 1.000000e+00 : f32
    %35 = vector.broadcast %cst_17 : f32 to vector<16x128xf32>
    %36 = arith.addf %35, %34 : vector<16x128xf32>
    %37 = arith.divf %35, %36 : vector<16x128xf32>
    %38 = vector.extract_strided_slice %37 {offsets = [0, 0], sizes = [16, 32], strides = [1, 1]} : vector<16x128xf32> to vector<16x32xf32>
    %39 = vector.extract_strided_slice %37 {offsets = [0, 32], sizes = [16, 32], strides = [1, 1]} : vector<16x128xf32> to vector<16x32xf32>
    %40 = vector.extract_strided_slice %37 {offsets = [0, 64], sizes = [16, 32], strides = [1, 1]} : vector<16x128xf32> to vector<16x32xf32>
    %cst_18 = arith.constant 2.000000e+00 : f32
    %41 = vector.broadcast %cst_18 : f32 to vector<16x32xf32>
    %42 = arith.mulf %41, %40 : vector<16x32xf32>
    %cst_19 = arith.constant 1.000000e+00 : f32
    %43 = vector.broadcast %cst_19 : f32 to vector<16x32xf32>
    %44 = arith.subf %42, %43 : vector<16x32xf32>
    %45 = vector.extract_strided_slice %37 {offsets = [0, 96], sizes = [16, 32], strides = [1, 1]} : vector<16x128xf32> to vector<16x32xf32>
    %46 = arith.mulf %39, %23 : vector<16x32xf32>
    %47 = arith.mulf %38, %44 : vector<16x32xf32>
    %48 = arith.addf %46, %47 : vector<16x32xf32>
    %49 = math.tanh %48 : vector<16x32xf32>
    %50 = arith.mulf %45, %49 : vector<16x32xf32>
    %51 = vector.extract_strided_slice %50 {offsets = [0, 0], sizes = [8, 32], strides = [1, 1]} : vector<16x32xf32> to vector<8x32xf32>
    %c0_20 = arith.constant 0 : index
    %c0_21 = arith.constant 0 : index
    %52 = vector.load %arg15[%c0_20, %c0_21] : memref<64x32xf32, #tpu.memory_space<vmem>>, vector<8x32xf32>
    tpu.vector_store %arg15[%c0_20, %c0_21], %51 {strides = array<i32>} : memref<64x32xf32, #tpu.memory_space<vmem>>, vector<8x32xf32>,
    %53 = vector.extract_strided_slice %50 {offsets = [8, 0], sizes = [8, 32], strides = [1, 1]} : vector<16x32xf32> to vector<8x32xf32>
    %c56 = arith.constant 56 : index
    %c0_22 = arith.constant 0 : index
    %54 = vector.load %arg16[%c56, %c0_22] : memref<64x32xf32, #tpu.memory_space<vmem>>, vector<8x32xf32>
    tpu.vector_store %arg16[%c56, %c0_22], %53 {strides = array<i32>} : memref<64x32xf32, #tpu.memory_space<vmem>>, vector<8x32xf32>,
    %cst_23 = arith.constant dense<0.000000e+00> : vector<16x256xf32>
    %55 = tpu.matmul %50, %12, %cst_23 {dimension_numbers = #tpu.dot_dimension_numbers<[1], [0], [0], [1], [0, 0, 1, 1], [], []>} : vector<16x32xf32>, vector<32x256xf32>, vector<16x256xf32> -> vector<16x256xf32>
    %56 = vector.extract_strided_slice %11 {offsets = [8, 0], sizes = [8, 128], strides = [1, 1]} : vector<64x256xf32> to vector<8x128xf32>
    %57 = vector.extract_strided_slice %55 {offsets = [0, 0], sizes = [8, 128], strides = [1, 1]} : vector<16x256xf32> to vector<8x128xf32>
    %58 = arith.addf %56, %57 : vector<8x128xf32>
    %59 = vector.extract_strided_slice %11 {offsets = [48, 128], sizes = [8, 128], strides = [1, 1]} : vector<64x256xf32> to vector<8x128xf32>
    %60 = vector.extract_strided_slice %55 {offsets = [8, 128], sizes = [8, 128], strides = [1, 1]} : vector<16x256xf32> to vector<8x128xf32>
    %61 = arith.addf %59, %60 : vector<8x128xf32>
    %62 = tpu.concatenate %58, %61 in 0 : vector<8x128xf32>, vector<8x128xf32> -> vector<16x128xf32>
    %63 = arith.mulf %62, %21 : vector<16x128xf32>
    %64 = arith.negf %63 : vector<16x128xf32>
    %65 = math.exp %64 : vector<16x128xf32>
    %cst_24 = arith.constant 1.000000e+00 : f32
    %66 = vector.broadcast %cst_24 : f32 to vector<16x128xf32>
    %67 = arith.addf %66, %65 : vector<16x128xf32>
    %68 = arith.divf %66, %67 : vector<16x128xf32>
    %69 = vector.extract_strided_slice %68 {offsets = [0, 0], sizes = [16, 32], strides = [1, 1]} : vector<16x128xf32> to vector<16x32xf32>
    %70 = vector.extract_strided_slice %68 {offsets = [0, 32], sizes = [16, 32], strides = [1, 1]} : vector<16x128xf32> to vector<16x32xf32>
    %71 = vector.extract_strided_slice %68 {offsets = [0, 64], sizes = [16, 32], strides = [1, 1]} : vector<16x128xf32> to vector<16x32xf32>
    %cst_25 = arith.constant 2.000000e+00 : f32
    %72 = vector.broadcast %cst_25 : f32 to vector<16x32xf32>
    %73 = arith.mulf %72, %71 : vector<16x32xf32>
    %cst_26 = arith.constant 1.000000e+00 : f32
    %74 = vector.broadcast %cst_26 : f32 to vector<16x32xf32>
    %75 = arith.subf %73, %74 : vector<16x32xf32>
    %76 = vector.extract_strided_slice %68 {offsets = [0, 96], sizes = [16, 32], strides = [1, 1]} : vector<16x128xf32> to vector<16x32xf32>
    %77 = arith.mulf %70, %48 : vector<16x32xf32>
    %78 = arith.mulf %69, %75 : vector<16x32xf32>
    %79 = arith.addf %77, %78 : vector<16x32xf32>
    %80 = math.tanh %79 : vector<16x32xf32>
    %81 = arith.mulf %76, %80 : vector<16x32xf32>
    %82 = vector.extract_strided_slice %81 {offsets = [0, 0], sizes = [8, 32], strides = [1, 1]} : vector<16x32xf32> to vector<8x32xf32>
    %c8 = arith.constant 8 : index
    %c0_27 = arith.constant 0 : index
    %83 = vector.load %arg15[%c8, %c0_27] : memref<64x32xf32, #tpu.memory_space<vmem>>, vector<8x32xf32>
    tpu.vector_store %arg15[%c8, %c0_27], %82 {strides = array<i32>} : memref<64x32xf32, #tpu.memory_space<vmem>>, vector<8x32xf32>,
    %84 = vector.extract_strided_slice %81 {offsets = [8, 0], sizes = [8, 32], strides = [1, 1]} : vector<16x32xf32> to vector<8x32xf32>
    %c48 = arith.constant 48 : index
    %c0_28 = arith.constant 0 : index
    %85 = vector.load %arg16[%c48, %c0_28] : memref<64x32xf32, #tpu.memory_space<vmem>>, vector<8x32xf32>
    tpu.vector_store %arg16[%c48, %c0_28], %84 {strides = array<i32>} : memref<64x32xf32, #tpu.memory_space<vmem>>, vector<8x32xf32>,
    %cst_29 = arith.constant dense<0.000000e+00> : vector<16x256xf32>
    %86 = tpu.matmul %81, %12, %cst_29 {dimension_numbers = #tpu.dot_dimension_numbers<[1], [0], [0], [1], [0, 0, 1, 1], [], []>} : vector<16x32xf32>, vector<32x256xf32>, vector<16x256xf32> -> vector<16x256xf32>
    %87 = vector.extract_strided_slice %11 {offsets = [16, 0], sizes = [8, 128], strides = [1, 1]} : vector<64x256xf32> to vector<8x128xf32>
    %88 = vector.extract_strided_slice %86 {offsets = [0, 0], sizes = [8, 128], strides = [1, 1]} : vector<16x256xf32> to vector<8x128xf32>
    %89 = arith.addf %87, %88 : vector<8x128xf32>
    %90 = vector.extract_strided_slice %11 {offsets = [40, 128], sizes = [8, 128], strides = [1, 1]} : vector<64x256xf32> to vector<8x128xf32>
    %91 = vector.extract_strided_slice %86 {offsets = [8, 128], sizes = [8, 128], strides = [1, 1]} : vector<16x256xf32> to vector<8x128xf32>
    %92 = arith.addf %90, %91 : vector<8x128xf32>
    %93 = tpu.concatenate %89, %92 in 0 : vector<8x128xf32>, vector<8x128xf32> -> vector<16x128xf32>
    %94 = arith.mulf %93, %21 : vector<16x128xf32>
    %95 = arith.negf %94 : vector<16x128xf32>
    %96 = math.exp %95 : vector<16x128xf32>
    %cst_30 = arith.constant 1.000000e+00 : f32
    %97 = vector.broadcast %cst_30 : f32 to vector<16x128xf32>
    %98 = arith.addf %97, %96 : vector<16x128xf32>
    %99 = arith.divf %97, %98 : vector<16x128xf32>
    %100 = vector.extract_strided_slice %99 {offsets = [0, 0], sizes = [16, 32], strides = [1, 1]} : vector<16x128xf32> to vector<16x32xf32>
    %101 = vector.extract_strided_slice %99 {offsets = [0, 32], sizes = [16, 32], strides = [1, 1]} : vector<16x128xf32> to vector<16x32xf32>
    %102 = vector.extract_strided_slice %99 {offsets = [0, 64], sizes = [16, 32], strides = [1, 1]} : vector<16x128xf32> to vector<16x32xf32>
    %cst_31 = arith.constant 2.000000e+00 : f32
    %103 = vector.broadcast %cst_31 : f32 to vector<16x32xf32>
    %104 = arith.mulf %103, %102 : vector<16x32xf32>
    %cst_32 = arith.constant 1.000000e+00 : f32
    %105 = vector.broadcast %cst_32 : f32 to vector<16x32xf32>
    %106 = arith.subf %104, %105 : vector<16x32xf32>
    %107 = vector.extract_strided_slice %99 {offsets = [0, 96], sizes = [16, 32], strides = [1, 1]} : vector<16x128xf32> to vector<16x32xf32>
    %108 = arith.mulf %101, %79 : vector<16x32xf32>
    %109 = arith.mulf %100, %106 : vector<16x32xf32>
    %110 = arith.addf %108, %109 : vector<16x32xf32>
    %111 = math.tanh %110 : vector<16x32xf32>
    %112 = arith.mulf %107, %111 : vector<16x32xf32>
    %113 = vector.extract_strided_slice %112 {offsets = [0, 0], sizes = [8, 32], strides = [1, 1]} : vector<16x32xf32> to vector<8x32xf32>
    %c16 = arith.constant 16 : index
    %c0_33 = arith.constant 0 : index
    %114 = vector.load %arg15[%c16, %c0_33] : memref<64x32xf32, #tpu.memory_space<vmem>>, vector<8x32xf32>
    tpu.vector_store %arg15[%c16, %c0_33], %113 {strides = array<i32>} : memref<64x32xf32, #tpu.memory_space<vmem>>, vector<8x32xf32>,
    %115 = vector.extract_strided_slice %112 {offsets = [8, 0], sizes = [8, 32], strides = [1, 1]} : vector<16x32xf32> to vector<8x32xf32>
    %c40 = arith.constant 40 : index
    %c0_34 = arith.constant 0 : index
    %116 = vector.load %arg16[%c40, %c0_34] : memref<64x32xf32, #tpu.memory_space<vmem>>, vector<8x32xf32>
    tpu.vector_store %arg16[%c40, %c0_34], %115 {strides = array<i32>} : memref<64x32xf32, #tpu.memory_space<vmem>>, vector<8x32xf32>,
    %cst_35 = arith.constant dense<0.000000e+00> : vector<16x256xf32>
    %117 = tpu.matmul %112, %12, %cst_35 {dimension_numbers = #tpu.dot_dimension_numbers<[1], [0], [0], [1], [0, 0, 1, 1], [], []>} : vector<16x32xf32>, vector<32x256xf32>, vector<16x256xf32> -> vector<16x256xf32>
    %118 = vector.extract_strided_slice %11 {offsets = [24, 0], sizes = [8, 128], strides = [1, 1]} : vector<64x256xf32> to vector<8x128xf32>
    %119 = vector.extract_strided_slice %117 {offsets = [0, 0], sizes = [8, 128], strides = [1, 1]} : vector<16x256xf32> to vector<8x128xf32>
    %120 = arith.addf %118, %119 : vector<8x128xf32>
    %121 = vector.extract_strided_slice %11 {offsets = [32, 128], sizes = [8, 128], strides = [1, 1]} : vector<64x256xf32> to vector<8x128xf32>
    %122 = vector.extract_strided_slice %117 {offsets = [8, 128], sizes = [8, 128], strides = [1, 1]} : vector<16x256xf32> to vector<8x128xf32>
    %123 = arith.addf %121, %122 : vector<8x128xf32>
    %124 = tpu.concatenate %120, %123 in 0 : vector<8x128xf32>, vector<8x128xf32> -> vector<16x128xf32>
    %125 = arith.mulf %124, %21 : vector<16x128xf32>
    %126 = arith.negf %125 : vector<16x128xf32>
    %127 = math.exp %126 : vector<16x128xf32>
    %cst_36 = arith.constant 1.000000e+00 : f32
    %128 = vector.broadcast %cst_36 : f32 to vector<16x128xf32>
    %129 = arith.addf %128, %127 : vector<16x128xf32>
    %130 = arith.divf %128, %129 : vector<16x128xf32>
    %131 = vector.extract_strided_slice %130 {offsets = [0, 0], sizes = [16, 32], strides = [1, 1]} : vector<16x128xf32> to vector<16x32xf32>
    %132 = vector.extract_strided_slice %130 {offsets = [0, 32], sizes = [16, 32], strides = [1, 1]} : vector<16x128xf32> to vector<16x32xf32>
    %133 = vector.extract_strided_slice %130 {offsets = [0, 64], sizes = [16, 32], strides = [1, 1]} : vector<16x128xf32> to vector<16x32xf32>
    %cst_37 = arith.constant 2.000000e+00 : f32
    %134 = vector.broadcast %cst_37 : f32 to vector<16x32xf32>
    %135 = arith.mulf %134, %133 : vector<16x32xf32>
    %cst_38 = arith.constant 1.000000e+00 : f32
    %136 = vector.broadcast %cst_38 : f32 to vector<16x32xf32>
    %137 = arith.subf %135, %136 : vector<16x32xf32>
    %138 = vector.extract_strided_slice %130 {offsets = [0, 96], sizes = [16, 32], strides = [1, 1]} : vector<16x128xf32> to vector<16x32xf32>
    %139 = arith.mulf %132, %110 : vector<16x32xf32>
    %140 = arith.mulf %131, %137 : vector<16x32xf32>
    %141 = arith.addf %139, %140 : vector<16x32xf32>
    %142 = math.tanh %141 : vector<16x32xf32>
    %143 = arith.mulf %138, %142 : vector<16x32xf32>
    %144 = vector.extract_strided_slice %143 {offsets = [0, 0], sizes = [8, 32], strides = [1, 1]} : vector<16x32xf32> to vector<8x32xf32>
    %c24 = arith.constant 24 : index
    %c0_39 = arith.constant 0 : index
    %145 = vector.load %arg15[%c24, %c0_39] : memref<64x32xf32, #tpu.memory_space<vmem>>, vector<8x32xf32>
    tpu.vector_store %arg15[%c24, %c0_39], %144 {strides = array<i32>} : memref<64x32xf32, #tpu.memory_space<vmem>>, vector<8x32xf32>,
    %146 = vector.extract_strided_slice %143 {offsets = [8, 0], sizes = [8, 32], strides = [1, 1]} : vector<16x32xf32> to vector<8x32xf32>
    %c32 = arith.constant 32 : index
    %c0_40 = arith.constant 0 : index
    %147 = vector.load %arg16[%c32, %c0_40] : memref<64x32xf32, #tpu.memory_space<vmem>>, vector<8x32xf32>
    tpu.vector_store %arg16[%c32, %c0_40], %146 {strides = array<i32>} : memref<64x32xf32, #tpu.memory_space<vmem>>, vector<8x32xf32>,
    %cst_41 = arith.constant dense<0.000000e+00> : vector<16x256xf32>
    %148 = tpu.matmul %143, %12, %cst_41 {dimension_numbers = #tpu.dot_dimension_numbers<[1], [0], [0], [1], [0, 0, 1, 1], [], []>} : vector<16x32xf32>, vector<32x256xf32>, vector<16x256xf32> -> vector<16x256xf32>
    %149 = vector.extract_strided_slice %11 {offsets = [32, 0], sizes = [8, 128], strides = [1, 1]} : vector<64x256xf32> to vector<8x128xf32>
    %150 = vector.extract_strided_slice %148 {offsets = [0, 0], sizes = [8, 128], strides = [1, 1]} : vector<16x256xf32> to vector<8x128xf32>
    %151 = arith.addf %149, %150 : vector<8x128xf32>
    %152 = vector.extract_strided_slice %11 {offsets = [24, 128], sizes = [8, 128], strides = [1, 1]} : vector<64x256xf32> to vector<8x128xf32>
    %153 = vector.extract_strided_slice %148 {offsets = [8, 128], sizes = [8, 128], strides = [1, 1]} : vector<16x256xf32> to vector<8x128xf32>
    %154 = arith.addf %152, %153 : vector<8x128xf32>
    %155 = tpu.concatenate %151, %154 in 0 : vector<8x128xf32>, vector<8x128xf32> -> vector<16x128xf32>
    %156 = arith.mulf %155, %21 : vector<16x128xf32>
    %157 = arith.negf %156 : vector<16x128xf32>
    %158 = math.exp %157 : vector<16x128xf32>
    %cst_42 = arith.constant 1.000000e+00 : f32
    %159 = vector.broadcast %cst_42 : f32 to vector<16x128xf32>
    %160 = arith.addf %159, %158 : vector<16x128xf32>
    %161 = arith.divf %159, %160 : vector<16x128xf32>
    %162 = vector.extract_strided_slice %161 {offsets = [0, 0], sizes = [16, 32], strides = [1, 1]} : vector<16x128xf32> to vector<16x32xf32>
    %163 = vector.extract_strided_slice %161 {offsets = [0, 32], sizes = [16, 32], strides = [1, 1]} : vector<16x128xf32> to vector<16x32xf32>
    %164 = vector.extract_strided_slice %161 {offsets = [0, 64], sizes = [16, 32], strides = [1, 1]} : vector<16x128xf32> to vector<16x32xf32>
    %cst_43 = arith.constant 2.000000e+00 : f32
    %165 = vector.broadcast %cst_43 : f32 to vector<16x32xf32>
    %166 = arith.mulf %165, %164 : vector<16x32xf32>
    %cst_44 = arith.constant 1.000000e+00 : f32
    %167 = vector.broadcast %cst_44 : f32 to vector<16x32xf32>
    %168 = arith.subf %166, %167 : vector<16x32xf32>
    %169 = vector.extract_strided_slice %161 {offsets = [0, 96], sizes = [16, 32], strides = [1, 1]} : vector<16x128xf32> to vector<16x32xf32>
    %170 = arith.mulf %163, %141 : vector<16x32xf32>
    %171 = arith.mulf %162, %168 : vector<16x32xf32>
    %172 = arith.addf %170, %171 : vector<16x32xf32>
    %173 = math.tanh %172 : vector<16x32xf32>
    %174 = arith.mulf %169, %173 : vector<16x32xf32>
    %175 = vector.extract_strided_slice %174 {offsets = [0, 0], sizes = [8, 32], strides = [1, 1]} : vector<16x32xf32> to vector<8x32xf32>
    %c32_45 = arith.constant 32 : index
    %c0_46 = arith.constant 0 : index
    %176 = vector.load %arg15[%c32_45, %c0_46] : memref<64x32xf32, #tpu.memory_space<vmem>>, vector<8x32xf32>
    tpu.vector_store %arg15[%c32_45, %c0_46], %175 {strides = array<i32>} : memref<64x32xf32, #tpu.memory_space<vmem>>, vector<8x32xf32>,
    %177 = vector.extract_strided_slice %174 {offsets = [8, 0], sizes = [8, 32], strides = [1, 1]} : vector<16x32xf32> to vector<8x32xf32>
    %c24_47 = arith.constant 24 : index
    %c0_48 = arith.constant 0 : index
    %178 = vector.load %arg16[%c24_47, %c0_48] : memref<64x32xf32, #tpu.memory_space<vmem>>, vector<8x32xf32>
    tpu.vector_store %arg16[%c24_47, %c0_48], %177 {strides = array<i32>} : memref<64x32xf32, #tpu.memory_space<vmem>>, vector<8x32xf32>,
    %cst_49 = arith.constant dense<0.000000e+00> : vector<16x256xf32>
    %179 = tpu.matmul %174, %12, %cst_49 {dimension_numbers = #tpu.dot_dimension_numbers<[1], [0], [0], [1], [0, 0, 1, 1], [], []>} : vector<16x32xf32>, vector<32x256xf32>, vector<16x256xf32> -> vector<16x256xf32>
    %180 = vector.extract_strided_slice %11 {offsets = [40, 0], sizes = [8, 128], strides = [1, 1]} : vector<64x256xf32> to vector<8x128xf32>
    %181 = vector.extract_strided_slice %179 {offsets = [0, 0], sizes = [8, 128], strides = [1, 1]} : vector<16x256xf32> to vector<8x128xf32>
    %182 = arith.addf %180, %181 : vector<8x128xf32>
    %183 = vector.extract_strided_slice %11 {offsets = [16, 128], sizes = [8, 128], strides = [1, 1]} : vector<64x256xf32> to vector<8x128xf32>
    %184 = vector.extract_strided_slice %179 {offsets = [8, 128], sizes = [8, 128], strides = [1, 1]} : vector<16x256xf32> to vector<8x128xf32>
    %185 = arith.addf %183, %184 : vector<8x128xf32>
    %186 = tpu.concatenate %182, %185 in 0 : vector<8x128xf32>, vector<8x128xf32> -> vector<16x128xf32>
    %187 = arith.mulf %186, %21 : vector<16x128xf32>
    %188 = arith.negf %187 : vector<16x128xf32>
    %189 = math.exp %188 : vector<16x128xf32>
    %cst_50 = arith.constant 1.000000e+00 : f32
    %190 = vector.broadcast %cst_50 : f32 to vector<16x128xf32>
    %191 = arith.addf %190, %189 : vector<16x128xf32>
    %192 = arith.divf %190, %191 : vector<16x128xf32>
    %193 = vector.extract_strided_slice %192 {offsets = [0, 0], sizes = [16, 32], strides = [1, 1]} : vector<16x128xf32> to vector<16x32xf32>
    %194 = vector.extract_strided_slice %192 {offsets = [0, 32], sizes = [16, 32], strides = [1, 1]} : vector<16x128xf32> to vector<16x32xf32>
    %195 = vector.extract_strided_slice %192 {offsets = [0, 64], sizes = [16, 32], strides = [1, 1]} : vector<16x128xf32> to vector<16x32xf32>
    %cst_51 = arith.constant 2.000000e+00 : f32
    %196 = vector.broadcast %cst_51 : f32 to vector<16x32xf32>
    %197 = arith.mulf %196, %195 : vector<16x32xf32>
    %cst_52 = arith.constant 1.000000e+00 : f32
    %198 = vector.broadcast %cst_52 : f32 to vector<16x32xf32>
    %199 = arith.subf %197, %198 : vector<16x32xf32>
    %200 = vector.extract_strided_slice %192 {offsets = [0, 96], sizes = [16, 32], strides = [1, 1]} : vector<16x128xf32> to vector<16x32xf32>
    %201 = arith.mulf %194, %172 : vector<16x32xf32>
    %202 = arith.mulf %193, %199 : vector<16x32xf32>
    %203 = arith.addf %201, %202 : vector<16x32xf32>
    %204 = math.tanh %203 : vector<16x32xf32>
    %205 = arith.mulf %200, %204 : vector<16x32xf32>
    %206 = vector.extract_strided_slice %205 {offsets = [0, 0], sizes = [8, 32], strides = [1, 1]} : vector<16x32xf32> to vector<8x32xf32>
    %c40_53 = arith.constant 40 : index
    %c0_54 = arith.constant 0 : index
    %207 = vector.load %arg15[%c40_53, %c0_54] : memref<64x32xf32, #tpu.memory_space<vmem>>, vector<8x32xf32>
    tpu.vector_store %arg15[%c40_53, %c0_54], %206 {strides = array<i32>} : memref<64x32xf32, #tpu.memory_space<vmem>>, vector<8x32xf32>,
    %208 = vector.extract_strided_slice %205 {offsets = [8, 0], sizes = [8, 32], strides = [1, 1]} : vector<16x32xf32> to vector<8x32xf32>
    %c16_55 = arith.constant 16 : index
    %c0_56 = arith.constant 0 : index
    %209 = vector.load %arg16[%c16_55, %c0_56] : memref<64x32xf32, #tpu.memory_space<vmem>>, vector<8x32xf32>
    tpu.vector_store %arg16[%c16_55, %c0_56], %208 {strides = array<i32>} : memref<64x32xf32, #tpu.memory_space<vmem>>, vector<8x32xf32>,
    %cst_57 = arith.constant dense<0.000000e+00> : vector<16x256xf32>
    %210 = tpu.matmul %205, %12, %cst_57 {dimension_numbers = #tpu.dot_dimension_numbers<[1], [0], [0], [1], [0, 0, 1, 1], [], []>} : vector<16x32xf32>, vector<32x256xf32>, vector<16x256xf32> -> vector<16x256xf32>
    %211 = vector.extract_strided_slice %11 {offsets = [48, 0], sizes = [8, 128], strides = [1, 1]} : vector<64x256xf32> to vector<8x128xf32>
    %212 = vector.extract_strided_slice %210 {offsets = [0, 0], sizes = [8, 128], strides = [1, 1]} : vector<16x256xf32> to vector<8x128xf32>
    %213 = arith.addf %211, %212 : vector<8x128xf32>
    %214 = vector.extract_strided_slice %11 {offsets = [8, 128], sizes = [8, 128], strides = [1, 1]} : vector<64x256xf32> to vector<8x128xf32>
    %215 = vector.extract_strided_slice %210 {offsets = [8, 128], sizes = [8, 128], strides = [1, 1]} : vector<16x256xf32> to vector<8x128xf32>
    %216 = arith.addf %214, %215 : vector<8x128xf32>
    %217 = tpu.concatenate %213, %216 in 0 : vector<8x128xf32>, vector<8x128xf32> -> vector<16x128xf32>
    %218 = arith.mulf %217, %21 : vector<16x128xf32>
    %219 = arith.negf %218 : vector<16x128xf32>
    %220 = math.exp %219 : vector<16x128xf32>
    %cst_58 = arith.constant 1.000000e+00 : f32
    %221 = vector.broadcast %cst_58 : f32 to vector<16x128xf32>
    %222 = arith.addf %221, %220 : vector<16x128xf32>
    %223 = arith.divf %221, %222 : vector<16x128xf32>
    %224 = vector.extract_strided_slice %223 {offsets = [0, 0], sizes = [16, 32], strides = [1, 1]} : vector<16x128xf32> to vector<16x32xf32>
    %225 = vector.extract_strided_slice %223 {offsets = [0, 32], sizes = [16, 32], strides = [1, 1]} : vector<16x128xf32> to vector<16x32xf32>
    %226 = vector.extract_strided_slice %223 {offsets = [0, 64], sizes = [16, 32], strides = [1, 1]} : vector<16x128xf32> to vector<16x32xf32>
    %cst_59 = arith.constant 2.000000e+00 : f32
    %227 = vector.broadcast %cst_59 : f32 to vector<16x32xf32>
    %228 = arith.mulf %227, %226 : vector<16x32xf32>
    %cst_60 = arith.constant 1.000000e+00 : f32
    %229 = vector.broadcast %cst_60 : f32 to vector<16x32xf32>
    %230 = arith.subf %228, %229 : vector<16x32xf32>
    %231 = vector.extract_strided_slice %223 {offsets = [0, 96], sizes = [16, 32], strides = [1, 1]} : vector<16x128xf32> to vector<16x32xf32>
    %232 = arith.mulf %225, %203 : vector<16x32xf32>
    %233 = arith.mulf %224, %230 : vector<16x32xf32>
    %234 = arith.addf %232, %233 : vector<16x32xf32>
    %235 = math.tanh %234 : vector<16x32xf32>
    %236 = arith.mulf %231, %235 : vector<16x32xf32>
    %237 = vector.extract_strided_slice %236 {offsets = [0, 0], sizes = [8, 32], strides = [1, 1]} : vector<16x32xf32> to vector<8x32xf32>
    %c48_61 = arith.constant 48 : index
    %c0_62 = arith.constant 0 : index
    %238 = vector.load %arg15[%c48_61, %c0_62] : memref<64x32xf32, #tpu.memory_space<vmem>>, vector<8x32xf32>
    tpu.vector_store %arg15[%c48_61, %c0_62], %237 {strides = array<i32>} : memref<64x32xf32, #tpu.memory_space<vmem>>, vector<8x32xf32>,
    %239 = vector.extract_strided_slice %236 {offsets = [8, 0], sizes = [8, 32], strides = [1, 1]} : vector<16x32xf32> to vector<8x32xf32>
    %c8_63 = arith.constant 8 : index
    %c0_64 = arith.constant 0 : index
    %240 = vector.load %arg16[%c8_63, %c0_64] : memref<64x32xf32, #tpu.memory_space<vmem>>, vector<8x32xf32>
    tpu.vector_store %arg16[%c8_63, %c0_64], %239 {strides = array<i32>} : memref<64x32xf32, #tpu.memory_space<vmem>>, vector<8x32xf32>,
    %cst_65 = arith.constant dense<0.000000e+00> : vector<16x256xf32>
    %241 = tpu.matmul %236, %12, %cst_65 {dimension_numbers = #tpu.dot_dimension_numbers<[1], [0], [0], [1], [0, 0, 1, 1], [], []>} : vector<16x32xf32>, vector<32x256xf32>, vector<16x256xf32> -> vector<16x256xf32>
    %242 = vector.extract_strided_slice %11 {offsets = [56, 0], sizes = [8, 128], strides = [1, 1]} : vector<64x256xf32> to vector<8x128xf32>
    %243 = vector.extract_strided_slice %241 {offsets = [0, 0], sizes = [8, 128], strides = [1, 1]} : vector<16x256xf32> to vector<8x128xf32>
    %244 = arith.addf %242, %243 : vector<8x128xf32>
    %245 = vector.extract_strided_slice %11 {offsets = [0, 128], sizes = [8, 128], strides = [1, 1]} : vector<64x256xf32> to vector<8x128xf32>
    %246 = vector.extract_strided_slice %241 {offsets = [8, 128], sizes = [8, 128], strides = [1, 1]} : vector<16x256xf32> to vector<8x128xf32>
    %247 = arith.addf %245, %246 : vector<8x128xf32>
    %248 = tpu.concatenate %244, %247 in 0 : vector<8x128xf32>, vector<8x128xf32> -> vector<16x128xf32>
    %249 = arith.mulf %248, %21 : vector<16x128xf32>
    %250 = arith.negf %249 : vector<16x128xf32>
    %251 = math.exp %250 : vector<16x128xf32>
    %cst_66 = arith.constant 1.000000e+00 : f32
    %252 = vector.broadcast %cst_66 : f32 to vector<16x128xf32>
    %253 = arith.addf %252, %251 : vector<16x128xf32>
    %254 = arith.divf %252, %253 : vector<16x128xf32>
    %255 = vector.extract_strided_slice %254 {offsets = [0, 0], sizes = [16, 32], strides = [1, 1]} : vector<16x128xf32> to vector<16x32xf32>
    %256 = vector.extract_strided_slice %254 {offsets = [0, 32], sizes = [16, 32], strides = [1, 1]} : vector<16x128xf32> to vector<16x32xf32>
    %257 = vector.extract_strided_slice %254 {offsets = [0, 64], sizes = [16, 32], strides = [1, 1]} : vector<16x128xf32> to vector<16x32xf32>
    %cst_67 = arith.constant 2.000000e+00 : f32
    %258 = vector.broadcast %cst_67 : f32 to vector<16x32xf32>
    %259 = arith.mulf %258, %257 : vector<16x32xf32>
    %cst_68 = arith.constant 1.000000e+00 : f32
    %260 = vector.broadcast %cst_68 : f32 to vector<16x32xf32>
    %261 = arith.subf %259, %260 : vector<16x32xf32>
    %262 = vector.extract_strided_slice %254 {offsets = [0, 96], sizes = [16, 32], strides = [1, 1]} : vector<16x128xf32> to vector<16x32xf32>
    %263 = arith.mulf %256, %234 : vector<16x32xf32>
    %264 = arith.mulf %255, %261 : vector<16x32xf32>
    %265 = arith.addf %263, %264 : vector<16x32xf32>
    %266 = math.tanh %265 : vector<16x32xf32>
    %267 = arith.mulf %262, %266 : vector<16x32xf32>
    %268 = vector.extract_strided_slice %267 {offsets = [0, 0], sizes = [8, 32], strides = [1, 1]} : vector<16x32xf32> to vector<8x32xf32>
    %c56_69 = arith.constant 56 : index
    %c0_70 = arith.constant 0 : index
    %269 = vector.load %arg15[%c56_69, %c0_70] : memref<64x32xf32, #tpu.memory_space<vmem>>, vector<8x32xf32>
    tpu.vector_store %arg15[%c56_69, %c0_70], %268 {strides = array<i32>} : memref<64x32xf32, #tpu.memory_space<vmem>>, vector<8x32xf32>,
    %270 = vector.extract_strided_slice %267 {offsets = [8, 0], sizes = [8, 32], strides = [1, 1]} : vector<16x32xf32> to vector<8x32xf32>
    %c0_71 = arith.constant 0 : index
    %c0_72 = arith.constant 0 : index
    %271 = vector.load %arg16[%c0_71, %c0_72] : memref<64x32xf32, #tpu.memory_space<vmem>>, vector<8x32xf32>
    tpu.vector_store %arg16[%c0_71, %c0_72], %270 {strides = array<i32>} : memref<64x32xf32, #tpu.memory_space<vmem>>, vector<8x32xf32>,
    %c0_73 = arith.constant 0 : index
    %c0_74 = arith.constant 0 : index
    %272 = vector.load %arg15[%c0_73, %c0_74] : memref<64x32xf32, #tpu.memory_space<vmem>>, vector<64x32xf32>
    %c0_75 = arith.constant 0 : index
    %c0_76 = arith.constant 0 : index
    %273 = vector.load %arg16[%c0_75, %c0_76] : memref<64x32xf32, #tpu.memory_space<vmem>>, vector<64x32xf32>
    %c0_77 = arith.constant 0 : index
    %c0_78 = arith.constant 0 : index
    %274 = vector.load %arg6[%c0_77, %c0_78] : memref<32x128xf32, #tpu.memory_space<vmem>>, vector<32x128xf32>
    %cst_79 = arith.constant dense<0.000000e+00> : vector<64x128xf32>
    %275 = tpu.matmul %272, %274, %cst_79 {dimension_numbers = #tpu.dot_dimension_numbers<[1], [0], [0], [1], [0, 0, 1, 1], [], []>} : vector<64x32xf32>, vector<32x128xf32>, vector<64x128xf32> -> vector<64x128xf32>
    %c0_80 = arith.constant 0 : index
    %c0_81 = arith.constant 0 : index
    %276 = vector.load %arg7[%c0_80, %c0_81] : memref<32x128xf32, #tpu.memory_space<vmem>>, vector<32x128xf32>
    %cst_82 = arith.constant dense<0.000000e+00> : vector<64x128xf32>
    %277 = tpu.matmul %273, %276, %cst_82 {dimension_numbers = #tpu.dot_dimension_numbers<[1], [0], [0], [1], [0, 0, 1, 1], [], []>} : vector<64x32xf32>, vector<32x128xf32>, vector<64x128xf32> -> vector<64x128xf32>
    %278 = arith.addf %275, %277 : vector<64x128xf32>
    %c0_83 = arith.constant 0 : index
    %c0_84 = arith.constant 0 : index
    %279 = vector.load %arg8[%c0_83, %c0_84] : memref<1x128xf32, #tpu.memory_space<vmem>>, vector<1x128xf32>
    %280 = vector.broadcast %279 : vector<1x128xf32> to vector<64x128xf32>
    %281 = arith.addf %278, %280 : vector<64x128xf32>
    %282 = math.tanh %281 : vector<64x128xf32>
    %c0_85 = arith.constant 0 : index
    %c0_86 = arith.constant 0 : index
    %283 = vector.load %arg9[%c0_85, %c0_86] : memref<128x128xf32, #tpu.memory_space<vmem>>, vector<128x128xf32>
    %cst_87 = arith.constant dense<0.000000e+00> : vector<64x128xf32>
    %284 = tpu.matmul %282, %283, %cst_87 {dimension_numbers = #tpu.dot_dimension_numbers<[1], [0], [0], [1], [0, 0, 1, 1], [], []>} : vector<64x128xf32>, vector<128x128xf32>, vector<64x128xf32> -> vector<64x128xf32>
    %285 = math.tanh %284 : vector<64x128xf32>
    %c0_88 = arith.constant 0 : index
    %c0_89 = arith.constant 0 : index
    %286 = vector.load %arg10[%c0_88, %c0_89] : memref<1x128xf32, #tpu.memory_space<vmem>>, vector<1x128xf32>
    %287 = vector.broadcast %286 : vector<1x128xf32> to vector<64x128xf32>
    %288 = arith.addf %285, %287 : vector<64x128xf32>
    %289 = math.tanh %288 : vector<64x128xf32>
    %c0_90 = arith.constant 0 : index
    %c0_91 = arith.constant 0 : index
    %290 = vector.load %arg11[%c0_90, %c0_91] : memref<128x128xf32, #tpu.memory_space<vmem>>, vector<128x128xf32>
    %cst_92 = arith.constant dense<0.000000e+00> : vector<64x128xf32>
    %291 = tpu.matmul %289, %290, %cst_92 {dimension_numbers = #tpu.dot_dimension_numbers<[1], [0], [0], [1], [0, 0, 1, 1], [], []>} : vector<64x128xf32>, vector<128x128xf32>, vector<64x128xf32> -> vector<64x128xf32>
    %c0_93 = arith.constant 0 : index
    %c0_94 = arith.constant 0 : index
    %292 = vector.load %arg12[%c0_93, %c0_94] : memref<1x128xf32, #tpu.memory_space<vmem>>, vector<1x128xf32>
    %293 = vector.broadcast %292 : vector<1x128xf32> to vector<64x128xf32>
    %294 = arith.addf %291, %293 : vector<64x128xf32>
    %295 = math.tanh %294 : vector<64x128xf32>
    %c0_95 = arith.constant 0 : index
    %c0_96 = arith.constant 0 : index
    %296 = vector.load %arg13[%c0_95, %c0_96] : memref<1x128xf32, #tpu.memory_space<vmem>>, vector<1x128xf32>
    %297 = vector.broadcast %296 : vector<1x128xf32> to vector<64x128xf32>
    %298 = arith.addf %295, %297 : vector<64x128xf32>
    %c0_97 = arith.constant 0 : index
    %c0_98 = arith.constant 0 : index
    %299 = vector.load %arg14[%c0_97, %c0_98] : memref<64x128xf32, #tpu.memory_space<vmem>>, vector<64x128xf32>
    tpu.vector_store %arg14[%c0_97, %c0_98], %298 {strides = array<i32>} : memref<64x128xf32, #tpu.memory_space<vmem>>, vector<64x128xf32>,
    return
  }
}

</mosaic_0001>

<llo_original>
// kernel: tpu_custom_call.1
$region0: #{tpu_custom_call.1}
  #allocation0 [shape = 'u32[]', space=smem, size = 0x4, offset = 0x4, fixed_abs, tag = 'smem constant byte address 0x4 - core index']
  #allocation1 [shape = 'u32[72,128]{1,0:T(1,128)}', space=vmem, size = 0x9000, scoped, tag = 'internal scratch']
  #allocation2 [shape = 'f32[64,32]{1,0:T(8,128)}', space=vmem, size = 0x8000, scoped, tag = 'scratch operand']
  #allocation3 [shape = 'f32[64,32]{1,0:T(8,128)}', space=vmem, size = 0x8000, scoped, tag = 'scratch operand']
  %s0 = inlined_call_operand.hbm [shape: f32[64,128], index: 0, kind: input, shape index: {}]
  %s1 = inlined_call_operand.vmem [shape: f32[128,32], index: 1, kind: input, shape index: {}]
  %s2 = inlined_call_operand.vmem [shape: f32[1,32], index: 2, kind: input, shape index: {}]
  %s3 = inlined_call_operand.hbm [shape: f32[32,256], index: 3, kind: input, shape index: {}]
  %s4 = inlined_call_operand.vmem [shape: f32[1,256], index: 4, kind: input, shape index: {}]
  %s5 = inlined_call_operand.hbm [shape: f32[32,256], index: 5, kind: input, shape index: {}]
  %s6 = inlined_call_operand.vmem [shape: f32[32,128], index: 6, kind: input, shape index: {}]
  %s7 = inlined_call_operand.hbm [shape: f32[32,128], index: 7, kind: input, shape index: {}]
  %s8 = inlined_call_operand.vmem [shape: f32[1,128], index: 8, kind: input, shape index: {}]
  %s9 = inlined_call_operand.vmem [shape: f32[128,128], index: 9, kind: input, shape index: {}]
  %s10 = inlined_call_operand.vmem [shape: f32[1,128], index: 10, kind: input, shape index: {}]
  %s11 = inlined_call_operand.hbm [shape: f32[128,128], index: 11, kind: input, shape index: {}]
  %s12 = inlined_call_operand.vmem [shape: f32[1,128], index: 12, kind: input, shape index: {}]
  %s13 = inlined_call_operand.vmem [shape: f32[1,128], index: 13, kind: input, shape index: {}]
  %s14 = inlined_call_operand.hbm [shape: f32[64,128], index: 14, kind: output, shape index: {}]
  %s15 = sld [smem:[#allocation0]]
  $region86: #{tpu_custom_call.1} parent=0
    _
  %s17 = ssub.s32 1, %s15
  %s18 = scalar_select 0, %s17, %s15
  $region1: #{tpu_custom_call.1} parent=0
    #allocation4 [shape = 'u8[32768]{0}', space=vmem, size = 0x8000, scoped, tag = 'input window, operand 0, single buffered']
    #allocation5 [shape = 's32[1]{0}', space=sflag, size = 0x4, scoped, tag = 'scoped memory for tpu_custom_call.1']
    #allocation6 [shape = 's32[1]{0}', space=sflag, size = 0x4, scoped, tag = 'scoped memory for tpu_custom_call.1']
    #allocation7 [shape = 'u8[32768]{0}', space=vmem, size = 0x8000, scoped, tag = 'input window, operand 3, single buffered']
    #allocation8 [shape = 's32[1]{0}', space=sflag, size = 0x4, scoped, tag = 'scoped memory for tpu_custom_call.1']
    #allocation9 [shape = 'u8[32768]{0}', space=vmem, size = 0x8000, scoped, tag = 'input window, operand 5, single buffered']
    #allocation10 [shape = 'u8[16384]{0}', space=vmem, size = 0x4000, scoped, tag = 'input window, operand 7, single buffered']
    #allocation11 [shape = 's32[1]{0}', space=sflag, size = 0x4, scoped, tag = 'scoped memory for tpu_custom_call.1']
    #allocation12 [shape = 'u8[65536]{0}', space=vmem, size = 0x10000, scoped, tag = 'input window, operand 11, single buffered']
    #allocation13 [shape = 'u8[32768]{0}', space=vmem, size = 0x8000, scoped, tag = 'output window, operand 0, single buffered']
    %19 = vsyncpa [#allocation5], 0
    %20 = vsyncpa [#allocation8], 0
    %21 = vsyncpa [#allocation11], 0
    %22 = vsyncpa [#allocation6], 0
    // Predicated region
    $region2: #{tpu_custom_call.1} parent=1 // pred_check
      _
    $region3: #{tpu_custom_call.1} parent=1 // pred_check_branch
      %24 = sbr.rel (0) target = $region5
    $region4: #{tpu_custom_call.1} parent=1 // pred_region
      %26 = vsyncadd [#allocation5], 0
      %s27 = sshll.u32 %s0, 4
      %s28 = int_to_ptr.hbm [resolvable:$true] %s27
      %s29 = sshll.u32 [#allocation4], 4
      %s30 = int_to_ptr.vmem [resolvable:$true] %s29
      %35 = dma.hbm_to_vmem [thread:$0]  %s28, 1024, %s30, [#allocation5], 128, 128, 8
    $region5: #{tpu_custom_call.1} parent=1 // pred_fallthru
      _
    // Predicated region
    $region6: #{tpu_custom_call.1} parent=1 // pred_check
      _
    $region7: #{tpu_custom_call.1} parent=1 // pred_check_branch
      %37 = sbr.rel (0) target = $region9
    $region8: #{tpu_custom_call.1} parent=1 // pred_region
      _
    $region9: #{tpu_custom_call.1} parent=1 // pred_fallthru
      _
    // Predicated region
    $region10: #{tpu_custom_call.1} parent=1 // pred_check
      _
    $region11: #{tpu_custom_call.1} parent=1 // pred_check_branch
      %39 = sbr.rel (0) target = $region13
    $region12: #{tpu_custom_call.1} parent=1 // pred_region
      _
    $region13: #{tpu_custom_call.1} parent=1 // pred_fallthru
      _
    // Predicated region
    $region14: #{tpu_custom_call.1} parent=1 // pred_check
      _
    $region15: #{tpu_custom_call.1} parent=1 // pred_check_branch
      %41 = sbr.rel (0) target = $region17
    $region16: #{tpu_custom_call.1} parent=1 // pred_region
      %43 = vsyncadd [#allocation8], 0
      %s44 = sshll.u32 %s3, 4
      %s45 = int_to_ptr.hbm [resolvable:$true] %s44
      %s46 = sshll.u32 [#allocation7], 4
      %s47 = int_to_ptr.vmem [resolvable:$true] %s46
      %52 = dma.hbm_to_vmem [thread:$0]  %s45, 1024, %s47, [#allocation8], 256, 256, 16
    $region17: #{tpu_custom_call.1} parent=1 // pred_fallthru
      _
    // Predicated region
    $region18: #{tpu_custom_call.1} parent=1 // pred_check
      _
    $region19: #{tpu_custom_call.1} parent=1 // pred_check_branch
      %54 = sbr.rel (0) target = $region21
    $region20: #{tpu_custom_call.1} parent=1 // pred_region
      _
    $region21: #{tpu_custom_call.1} parent=1 // pred_fallthru
      _
    // Predicated region
    $region22: #{tpu_custom_call.1} parent=1 // pred_check
      _
    $region23: #{tpu_custom_call.1} parent=1 // pred_check_branch
      %56 = sbr.rel (0) target = $region25
    $region24: #{tpu_custom_call.1} parent=1 // pred_region
      %58 = vsyncadd [#allocation8], 0
      %s59 = sshll.u32 %s5, 4
      %s60 = int_to_ptr.hbm [resolvable:$true] %s59
      %s61 = sshll.u32 [#allocation9], 4
      %s62 = int_to_ptr.vmem [resolvable:$true] %s61
      %67 = dma.hbm_to_vmem [thread:$0]  %s60, 1024, %s62, [#allocation8], 256, 256, 16
    $region25: #{tpu_custom_call.1} parent=1 // pred_fallthru
      _
    // Predicated region
    $region26: #{tpu_custom_call.1} parent=1 // pred_check
      _
    $region27: #{tpu_custom_call.1} parent=1 // pred_check_branch
      %69 = sbr.rel (0) target = $region29
    $region28: #{tpu_custom_call.1} parent=1 // pred_region
      _
    $region29: #{tpu_custom_call.1} parent=1 // pred_fallthru
      _
    // Predicated region
    $region30: #{tpu_custom_call.1} parent=1 // pred_check
      _
    $region31: #{tpu_custom_call.1} parent=1 // pred_check_branch
      %71 = sbr.rel (0) target = $region33
    $region32: #{tpu_custom_call.1} parent=1 // pred_region
      %73 = vsyncadd [#allocation11], 0
      %s74 = sshll.u32 %s7, 4
      %s75 = int_to_ptr.hbm [resolvable:$true] %s74
      %s76 = sshll.u32 [#allocation10], 4
      %s77 = int_to_ptr.vmem [resolvable:$true] %s76
      %82 = dma.hbm_to_vmem [thread:$0]  %s75, 512, %s77, [#allocation11], 128, 128, 8
    $region33: #{tpu_custom_call.1} parent=1 // pred_fallthru
      _
    // Predicated region
    $region34: #{tpu_custom_call.1} parent=1 // pred_check
      _
    $region35: #{tpu_custom_call.1} parent=1 // pred_check_branch
      %84 = sbr.rel (0) target = $region37
    $region36: #{tpu_custom_call.1} parent=1 // pred_region
      _
    $region37: #{tpu_custom_call.1} parent=1 // pred_fallthru
      _
    // Predicated region
    $region38: #{tpu_custom_call.1} parent=1 // pred_check
      _
    $region39: #{tpu_custom_call.1} parent=1 // pred_check_branch
      %86 = sbr.rel (0) target = $region41
    $region40: #{tpu_custom_call.1} parent=1 // pred_region
      _
    $region41: #{tpu_custom_call.1} parent=1 // pred_fallthru
      _
    // Predicated region
    $region42: #{tpu_custom_call.1} parent=1 // pred_check
      _
    $region43: #{tpu_custom_call.1} parent=1 // pred_check_branch
      %88 = sbr.rel (0) target = $region45
    $region44: #{tpu_custom_call.1} parent=1 // pred_region
      _
    $region45: #{tpu_custom_call.1} parent=1 // pred_fallthru
      _
    // Predicated region
    $region46: #{tpu_custom_call.1} parent=1 // pred_check
      _
    $region47: #{tpu_custom_call.1} parent=1 // pred_check_branch
      %90 = sbr.rel (0) target = $region49
    $region48: #{tpu_custom_call.1} parent=1 // pred_region
      %92 = vsyncadd [#allocation11], 0
      %s93 = sshll.u32 %s11, 4
      %s94 = int_to_ptr.hbm [resolvable:$true] %s93
      %s95 = sshll.u32 [#allocation12], 4
      %s96 = int_to_ptr.vmem [resolvable:$true] %s95
      %101 = dma.hbm_to_vmem [thread:$0]  %s94, 2048, %s96, [#allocation11], 128, 128, 8
    $region49: #{tpu_custom_call.1} parent=1 // pred_fallthru
      _
    // Predicated region
    $region50: #{tpu_custom_call.1} parent=1 // pred_check
      _
    $region51: #{tpu_custom_call.1} parent=1 // pred_check_branch
      %103 = sbr.rel (0) target = $region53
    $region52: #{tpu_custom_call.1} parent=1 // pred_region
      _
    $region53: #{tpu_custom_call.1} parent=1 // pred_fallthru
      _
    // Predicated region
    $region54: #{tpu_custom_call.1} parent=1 // pred_check
      _
    $region55: #{tpu_custom_call.1} parent=1 // pred_check_branch
      %105 = sbr.rel (0) target = $region57
    $region56: #{tpu_custom_call.1} parent=1 // pred_region
      _
    $region57: #{tpu_custom_call.1} parent=1 // pred_fallthru
      _
    // Predicated region
    $region58: #{tpu_custom_call.1} parent=1 // pred_check
      _
    $region59: #{tpu_custom_call.1} parent=1 // pred_check_branch
      %107 = sbr.rel (0) target = $region61
    $region60: #{tpu_custom_call.1} parent=1 // pred_region
      %109 = dma.done [#allocation5], 1024
    $region61: #{tpu_custom_call.1} parent=1 // pred_fallthru
      _
    // Predicated region
    $region62: #{tpu_custom_call.1} parent=1 // pred_check
      _
    $region63: #{tpu_custom_call.1} parent=1 // pred_check_branch
      %111 = sbr.rel (0) target = $region65
    $region64: #{tpu_custom_call.1} parent=1 // pred_region
      %113 = dma.done [#allocation8], 1024
    $region65: #{tpu_custom_call.1} parent=1 // pred_fallthru
      _
    // Predicated region
    $region66: #{tpu_custom_call.1} parent=1 // pred_check
      _
    $region67: #{tpu_custom_call.1} parent=1 // pred_check_branch
      %115 = sbr.rel (0) target = $region69
    $region68: #{tpu_custom_call.1} parent=1 // pred_region
      %117 = dma.done [#allocation8], 1024
    $region69: #{tpu_custom_call.1} parent=1 // pred_fallthru
      _
    // Predicated region
    $region70: #{tpu_custom_call.1} parent=1 // pred_check
      _
    $region71: #{tpu_custom_call.1} parent=1 // pred_check_branch
      %119 = sbr.rel (0) target = $region73
    $region72: #{tpu_custom_call.1} parent=1 // pred_region
      %121 = dma.done [#allocation11], 512
    $region73: #{tpu_custom_call.1} parent=1 // pred_fallthru
      _
    // Predicated region
    $region74: #{tpu_custom_call.1} parent=1 // pred_check
      _
    $region75: #{tpu_custom_call.1} parent=1 // pred_check_branch
      %123 = sbr.rel (0) target = $region77
    $region76: #{tpu_custom_call.1} parent=1 // pred_region
      %125 = dma.done [#allocation11], 2048
    $region77: #{tpu_custom_call.1} parent=1 // pred_fallthru
      _
    %v126 = vld [vmem:[#allocation4] sm:$0xff]
    %v127 = vld [vmem:[#allocation4 + $0x8] sm:$0xff]
    %v128 = vld [vmem:[#allocation4 + $0x10] sm:$0xff]
    %v129 = vld [vmem:[#allocation4 + $0x18] sm:$0xff]
    %v130 = vld [vmem:[#allocation4 + $0x20] sm:$0xff]
    %v131 = vld [vmem:[#allocation4 + $0x28] sm:$0xff]
    %v132 = vld [vmem:[#allocation4 + $0x30] sm:$0xff]
    %v133 = vld [vmem:[#allocation4 + $0x38] sm:$0xff]
    %v134 = vld [vmem:[%s1] sm:$0xff]
    %v135 = vld [vmem:[%s1 + $0x8] sm:$0xff]
    %v136 = vld [vmem:[%s1 + $0x10] sm:$0xff]
    %v137 = vld [vmem:[%s1 + $0x18] sm:$0xff]
    %v138 = vld [vmem:[%s1 + $0x20] sm:$0xff]
    %v139 = vld [vmem:[%s1 + $0x28] sm:$0xff]
    %v140 = vld [vmem:[%s1 + $0x30] sm:$0xff]
    %v141 = vld [vmem:[%s1 + $0x38] sm:$0xff]
    %v142 = vld [vmem:[%s1 + $0x40] sm:$0xff]
    %v143 = vld [vmem:[%s1 + $0x48] sm:$0xff]
    %v144 = vld [vmem:[%s1 + $0x50] sm:$0xff]
    %v145 = vld [vmem:[%s1 + $0x58] sm:$0xff]
    %v146 = vld [vmem:[%s1 + $0x60] sm:$0xff]
    %v147 = vld [vmem:[%s1 + $0x68] sm:$0xff]
    %v148 = vld [vmem:[%s1 + $0x70] sm:$0xff]
    %v149 = vld [vmem:[%s1 + $0x78] sm:$0xff]
    %v150 = vld [vmem:[%s2] sm:$0x1]
    %v152 = vperm.slane %v150, 0
    %154 = vmatpush.msra.mxu0 %v149
    %155 = vmatpush.msra.mxu0 %v148
    %156 = vmatpush.msra.mxu0 %v147
    %157 = vmatpush.msra.mxu0 %v146
    %158 = vmatpush.msra.mxu0 %v145
    %159 = vmatpush.msra.mxu0 %v144
    %160 = vmatpush.msra.mxu0 %v143
    %161 = vmatpush.msra.mxu0 %v142
    %162 = vmatpush.msra.mxu0 %v141
    %163 = vmatpush.msra.mxu0 %v140
    %164 = vmatpush.msra.mxu0 %v139
    %165 = vmatpush.msra.mxu0 %v138
    %166 = vmatpush.msra.mxu0 %v137
    %167 = vmatpush.msra.mxu0 %v136
    %168 = vmatpush.msra.mxu0 %v135
    %169 = vmatpush.msra.mxu0 %v134
    %170 = vmatmul.f32.gmra.mxu0 %v126
    %v171 = vpop.f32.mrf.mxu0
    %v172 = vadd.f32 %v152, %v171
    %173 = vmatmul.f32.gmra.mxu0 %v127
    %v174 = vpop.f32.mrf.mxu0
    %v175 = vadd.f32 %v152, %v174
    %176 = vmatmul.f32.gmra.mxu0 %v128
    %v177 = vpop.f32.mrf.mxu0
    %v178 = vadd.f32 %v152, %v177
    %179 = vmatmul.f32.gmra.mxu0 %v129
    %v180 = vpop.f32.mrf.mxu0
    %v181 = vadd.f32 %v152, %v180
    %182 = vmatmul.f32.gmra.mxu0 %v130
    %v183 = vpop.f32.mrf.mxu0
    %v184 = vadd.f32 %v152, %v183
    %185 = vmatmul.f32.gmra.mxu0 %v131
    %v186 = vpop.f32.mrf.mxu0
    %v187 = vadd.f32 %v152, %v186
    %188 = vmatmul.f32.gmra.mxu0 %v132
    %v189 = vpop.f32.mrf.mxu0
    %v190 = vadd.f32 %v152, %v189
    %191 = vmatmul.f32.gmra.mxu0 %v133
    %v192 = vpop.f32.mrf.mxu0
    %v193 = vadd.f32 %v152, %v192
    %194 = vdwg.mxu0
    %v195 = vtanh.pop %v172
    %v196 = vtanh.pop %v175
    %v197 = vtanh.pop %v178
    %v198 = vtanh.pop %v181
    %v199 = vtanh.pop %v184
    %v200 = vtanh.pop %v187
    %v201 = vtanh.pop %v190
    %v202 = vtanh.pop %v193
    %v203 = vld [vmem:[#allocation7] sm:$0xff]
    %v204 = vld [vmem:[#allocation7 + $0x8] sm:$0xff]
    %v205 = vld [vmem:[#allocation7 + $0x10] sm:$0xff]
    %v206 = vld [vmem:[#allocation7 + $0x18] sm:$0xff]
    %v207 = vld [vmem:[#allocation7 + $0x20] sm:$0xff]
    %v208 = vld [vmem:[#allocation7 + $0x28] sm:$0xff]
    %v209 = vld [vmem:[#allocation7 + $0x30] sm:$0xff]
    %v210 = vld [vmem:[#allocation7 + $0x38] sm:$0xff]
    %v211 = vld [vmem:[%s4] sm:$0x3]
    %v213 = vperm.slane %v211, 0
    %v214 = vperm.slane %v211, 1
    %vm217 = vcmask 261120
    %v219 = vsel %vm217, %v195, 0
    %v222 = vsel %vm217, %v196, 0
    %v225 = vsel %vm217, %v197, 0
    %v228 = vsel %vm217, %v198, 0
    %v231 = vsel %vm217, %v199, 0
    %v234 = vsel %vm217, %v200, 0
    %v237 = vsel %vm217, %v201, 0
    %v240 = vsel %vm217, %v202, 0
    %242 = vmatpush.msra.mxu0 0.0
    %243 = vmatpush.msra.mxu0 0.0
    %244 = vmatpush.msra.mxu0 0.0
    %245 = vmatpush.msra.mxu0 0.0
    %246 = vmatpush.msra.mxu0 0.0
    %247 = vmatpush.msra.mxu0 0.0
    %248 = vmatpush.msra.mxu0 0.0
    %249 = vmatpush.msra.mxu0 0.0
    %250 = vmatpush.msra.mxu0 0.0
    %251 = vmatpush.msra.mxu0 0.0
    %252 = vmatpush.msra.mxu0 0.0
    %253 = vmatpush.msra.mxu0 0.0
    %254 = vmatpush.msra.mxu0 %v209
    %255 = vmatpush.msra.mxu0 %v207
    %256 = vmatpush.msra.mxu0 %v205
    %257 = vmatpush.msra.mxu0 %v203
    %258 = vmatmul.f32.gmra.mxu0 %v219
    %v259 = vpop.f32.mrf.mxu0
    %v260 = vadd.f32 %v213, %v259
    %261 = vmatmul.f32.gmra.mxu0 %v222
    %v262 = vpop.f32.mrf.mxu0
    %v263 = vadd.f32 %v213, %v262
    %264 = vmatmul.f32.gmra.mxu0 %v225
    %v265 = vpop.f32.mrf.mxu0
    %v266 = vadd.f32 %v213, %v265
    %267 = vmatmul.f32.gmra.mxu0 %v228
    %v268 = vpop.f32.mrf.mxu0
    %v269 = vadd.f32 %v213, %v268
    %270 = vmatmul.f32.gmra.mxu0 %v231
    %v271 = vpop.f32.mrf.mxu0
    %v272 = vadd.f32 %v213, %v271
    %273 = vmatmul.f32.gmra.mxu0 %v234
    %v274 = vpop.f32.mrf.mxu0
    %v275 = vadd.f32 %v213, %v274
    %276 = vmatmul.f32.gmra.mxu0 %v237
    %v277 = vpop.f32.mrf.mxu0
    %v278 = vadd.f32 %v213, %v277
    %279 = vmatmul.f32.gmra.mxu0 %v240
    %v280 = vpop.f32.mrf.mxu0
    %v281 = vadd.f32 %v213, %v280
    %282 = vdwg.mxu0
    %283 = vmatpush.msra.mxu0 0.0
    %284 = vmatpush.msra.mxu0 0.0
    %285 = vmatpush.msra.mxu0 0.0
    %286 = vmatpush.msra.mxu0 0.0
    %287 = vmatpush.msra.mxu0 0.0
    %288 = vmatpush.msra.mxu0 0.0
    %289 = vmatpush.msra.mxu0 0.0
    %290 = vmatpush.msra.mxu0 0.0
    %291 = vmatpush.msra.mxu0 0.0
    %292 = vmatpush.msra.mxu0 0.0
    %293 = vmatpush.msra.mxu0 0.0
    %294 = vmatpush.msra.mxu0 0.0
    %295 = vmatpush.msra.mxu0 %v210
    %296 = vmatpush.msra.mxu0 %v208
    %297 = vmatpush.msra.mxu0 %v206
    %298 = vmatpush.msra.mxu0 %v204
    %299 = vmatmul.f32.gmra.mxu0 %v219
    %v300 = vpop.f32.mrf.mxu0
    %v301 = vadd.f32 %v214, %v300
    %302 = vmatmul.f32.gmra.mxu0 %v222
    %v303 = vpop.f32.mrf.mxu0
    %v304 = vadd.f32 %v214, %v303
    %305 = vmatmul.f32.gmra.mxu0 %v225
    %v306 = vpop.f32.mrf.mxu0
    %v307 = vadd.f32 %v214, %v306
    %308 = vmatmul.f32.gmra.mxu0 %v228
    %v309 = vpop.f32.mrf.mxu0
    %v310 = vadd.f32 %v214, %v309
    %311 = vmatmul.f32.gmra.mxu0 %v231
    %v312 = vpop.f32.mrf.mxu0
    %v313 = vadd.f32 %v214, %v312
    %314 = vmatmul.f32.gmra.mxu0 %v234
    %v315 = vpop.f32.mrf.mxu0
    %v316 = vadd.f32 %v214, %v315
    %317 = vmatmul.f32.gmra.mxu0 %v237
    %v318 = vpop.f32.mrf.mxu0
    %v319 = vadd.f32 %v214, %v318
    %320 = vmatmul.f32.gmra.mxu0 %v240
    %v321 = vpop.f32.mrf.mxu0
    %v322 = vadd.f32 %v214, %v321
    %323 = vdwg.mxu0
    %v324 = vld [vmem:[#allocation9] sm:$0xff]
    %v325 = vld [vmem:[#allocation9 + $0x8] sm:$0xff]
    %v326 = vld [vmem:[#allocation9 + $0x10] sm:$0xff]
    %v327 = vld [vmem:[#allocation9 + $0x18] sm:$0xff]
    %v328 = vld [vmem:[#allocation9 + $0x20] sm:$0xff]
    %v329 = vld [vmem:[#allocation9 + $0x28] sm:$0xff]
    %v330 = vld [vmem:[#allocation9 + $0x30] sm:$0xff]
    %v331 = vld [vmem:[#allocation9 + $0x38] sm:$0xff]
    %v332 = vlaneseq
    %v333 = vand.u32 %v332, 127
    %vm334 = vcmp.ge.s32.totalorder %v333, 64
    %vm335 = vcmp.lt.s32.totalorder %v333, 96
    %vm336 = vmand %vm334, %vm335
    %v337 = vsel %vm336, 2.0, 1.0
    %v339 = vsel %vm217, 0.0, 0
    %341 = vmatpush.msra.mxu0 0.0
    %342 = vmatpush.msra.mxu0 0.0
    %343 = vmatpush.msra.mxu0 0.0
    %344 = vmatpush.msra.mxu0 0.0
    %345 = vmatpush.msra.mxu0 0.0
    %346 = vmatpush.msra.mxu0 0.0
    %347 = vmatpush.msra.mxu0 0.0
    %348 = vmatpush.msra.mxu0 0.0
    %349 = vmatpush.msra.mxu0 0.0
    %350 = vmatpush.msra.mxu0 0.0
    %351 = vmatpush.msra.mxu0 0.0
    %352 = vmatpush.msra.mxu0 0.0
    %353 = vmatpush.msra.mxu0 %v330
    %354 = vmatpush.msra.mxu0 %v328
    %355 = vmatpush.msra.mxu0 %v326
    %356 = vmatpush.msra.mxu0 %v324
    %357 = vmatmul.f32.gmra.mxu0 %v339
    %v358 = vpop.f32.mrf.mxu0
    %v359 = vadd.f32 0.0, %v358
    %360 = vmatmul.f32.gmra.mxu0 %v339
    %v361 = vpop.f32.mrf.mxu0
    %362 = vdwg.mxu0
    %363 = vmatpush.msra.mxu0 0.0
    %364 = vmatpush.msra.mxu0 0.0
    %365 = vmatpush.msra.mxu0 0.0
    %366 = vmatpush.msra.mxu0 0.0
    %367 = vmatpush.msra.mxu0 0.0
    %368 = vmatpush.msra.mxu0 0.0
    %369 = vmatpush.msra.mxu0 0.0
    %370 = vmatpush.msra.mxu0 0.0
    %371 = vmatpush.msra.mxu0 0.0
    %372 = vmatpush.msra.mxu0 0.0
    %373 = vmatpush.msra.mxu0 0.0
    %374 = vmatpush.msra.mxu0 0.0
    %375 = vmatpush.msra.mxu0 %v331
    %376 = vmatpush.msra.mxu0 %v329
    %377 = vmatpush.msra.mxu0 %v327
    %378 = vmatpush.msra.mxu0 %v325
    %379 = vmatmul.f32.gmra.mxu0 %v339
    %v380 = vpop.f32.mrf.mxu0
    %381 = vmatmul.f32.gmra.mxu0 %v339
    %v382 = vpop.f32.mrf.mxu0
    %v383 = vadd.f32 0.0, %v382
    %384 = vdwg.mxu0
    %v385 = vadd.f32 %v260, %v359
    %v386 = vadd.f32 %v322, %v383
    %v387 = vmul.f32 %v385, %v337
    %v388 = vmul.f32 %v386, %v337
    %v389 = vxor.u32 %v387, 2147483648
    %v390 = vxor.u32 %v388, 2147483648
    %v391 = vmul.f32 %v389, 1.442695
    %v392 = vpow.pop %v391
    %v393 = vmul.f32 %v390, 1.442695
    %v394 = vpow.pop %v393
    %v395 = vadd.f32 %v392, 1.0
    %v396 = vadd.f32 %v394, 1.0
    %v397 = vrcp.pop %v395
    %v398 = vmul.f32 %v395, %v397
    %v399 = vsub.f32 1.0, %v398
    %v400 = vmul.f32 %v397, %v399
    %v401 = vadd.f32 %v397, %v400
    %vm402 = vweird.f32 %v395
    %vm403 = vweird.f32 %v397
    %vm404 = vmor %vm402, %vm403
    %v405 = vsel %vm404, %v397, %v401
    %v406 = vand.u32 2147483647, %v395
    %vm407 = vcmp.eq.f32.partialorder %v406, 8.507059e+37
    %v408 = vand.u32 %v395, 2147483648
    %v409 = vor.u32 1.1754944e-38, %v408
    %v410 = vsel %vm407, %v409, %v405
    %v411 = vmul.f32 1.0, %v410
    %v412 = vrcp.pop %v396
    %v413 = vmul.f32 %v396, %v412
    %v414 = vsub.f32 1.0, %v413
    %v415 = vmul.f32 %v412, %v414
    %v416 = vadd.f32 %v412, %v415
    %vm417 = vweird.f32 %v396
    %vm418 = vweird.f32 %v412
    %vm419 = vmor %vm417, %vm418
    %v420 = vsel %vm419, %v412, %v416
    %v421 = vand.u32 2147483647, %v396
    %vm422 = vcmp.eq.f32.partialorder %v421, 8.507059e+37
    %v423 = vand.u32 %v396, 2147483648
    %v424 = vor.u32 1.1754944e-38, %v423
    %v425 = vsel %vm422, %v424, %v420
    %v426 = vmul.f32 1.0, %v425
    %v427 = vmul.f32 %v411, 2.0
    %v428 = vmul.f32 %v426, 2.0
    %v429 = vsub.f32 %v427, 1.0
    %v430 = vsub.f32 %v428, 1.0
    %v431 = vmul.f32 %v411, 0.0
    %v432 = vmul.f32 %v426, 0.0
    %435 = vrot.lane.b32.xlu0 %v429, 64
    %v436 = vpop.permute.xlu0 %435
    %437 = vrot.lane.b32.xlu0 %v430, 64
    %v438 = vpop.permute.xlu0 %437
    %v441 = vmul.f32 %v411, %v436
    %v442 = vmul.f32 %v426, %v438
    %445 = vrot.lane.b32.xlu0 %v441, 32
    %v446 = vpop.permute.xlu0 %445
    %447 = vrot.lane.b32.xlu0 %v442, 32
    %v448 = vpop.permute.xlu0 %447
    %v451 = vadd.f32 %v431, %v446
    %v452 = vadd.f32 %v432, %v448
    %v453 = vtanh.pop %v451
    %v454 = vtanh.pop %v452
    %457 = vrot.lane.b32.xlu0 %v453, 64
    %v458 = vpop.permute.xlu0 %457
    %459 = vrot.lane.b32.xlu0 %v454, 64
    %v460 = vpop.permute.xlu0 %459
    %v463 = vmul.f32 %v411, %v458
    %v464 = vmul.f32 %v426, %v460
    %466 = vrot.lane.b32.xlu0 %v463, 32
    %v467 = vpop.permute.xlu0 %466
    %469 = vst.msk [vmem:[#allocation2] sm:$0xff] %vm217, %v467
    %471 = vrot.lane.b32.xlu0 %v464, 32
    %v472 = vpop.permute.xlu0 %471
    %474 = vst.msk [vmem:[#allocation3 + $0x38] sm:$0xff] %vm217, %v472
    %v475 = vsel %vm217, %v467, 0
    %v477 = vsel %vm217, %v472, 0
    %479 = vmatpush.msra.mxu0 0.0
    %480 = vmatpush.msra.mxu0 0.0
    %481 = vmatpush.msra.mxu0 0.0
    %482 = vmatpush.msra.mxu0 0.0
    %483 = vmatpush.msra.mxu0 0.0
    %484 = vmatpush.msra.mxu0 0.0
    %485 = vmatpush.msra.mxu0 0.0
    %486 = vmatpush.msra.mxu0 0.0
    %487 = vmatpush.msra.mxu0 0.0
    %488 = vmatpush.msra.mxu0 0.0
    %489 = vmatpush.msra.mxu0 0.0
    %490 = vmatpush.msra.mxu0 0.0
    %491 = vmatpush.msra.mxu0 %v330
    %492 = vmatpush.msra.mxu0 %v328
    %493 = vmatpush.msra.mxu0 %v326
    %494 = vmatpush.msra.mxu0 %v324
    %495 = vmatmul.f32.gmra.mxu0 %v475
    %v496 = vpop.f32.mrf.mxu0
    %v497 = vadd.f32 0.0, %v496
    %498 = vmatmul.f32.gmra.mxu0 %v477
    %v499 = vpop.f32.mrf.mxu0
    %500 = vdwg.mxu0
    %501 = vmatpush.msra.mxu0 0.0
    %502 = vmatpush.msra.mxu0 0.0
    %503 = vmatpush.msra.mxu0 0.0
    %504 = vmatpush.msra.mxu0 0.0
    %505 = vmatpush.msra.mxu0 0.0
    %506 = vmatpush.msra.mxu0 0.0
    %507 = vmatpush.msra.mxu0 0.0
    %508 = vmatpush.msra.mxu0 0.0
    %509 = vmatpush.msra.mxu0 0.0
    %510 = vmatpush.msra.mxu0 0.0
    %511 = vmatpush.msra.mxu0 0.0
    %512 = vmatpush.msra.mxu0 0.0
    %513 = vmatpush.msra.mxu0 %v331
    %514 = vmatpush.msra.mxu0 %v329
    %515 = vmatpush.msra.mxu0 %v327
    %516 = vmatpush.msra.mxu0 %v325
    %517 = vmatmul.f32.gmra.mxu0 %v475
    %v518 = vpop.f32.mrf.mxu0
    %519 = vmatmul.f32.gmra.mxu0 %v477
    %v520 = vpop.f32.mrf.mxu0
    %v521 = vadd.f32 0.0, %v520
    %522 = vdwg.mxu0
    %v523 = vadd.f32 %v263, %v497
    %v524 = vadd.f32 %v319, %v521
    %v525 = vmul.f32 %v523, %v337
    %v526 = vmul.f32 %v524, %v337
    %v527 = vxor.u32 %v525, 2147483648
    %v528 = vxor.u32 %v526, 2147483648
    %v529 = vmul.f32 %v527, 1.442695
    %v530 = vpow.pop %v529
    %v531 = vmul.f32 %v528, 1.442695
    %v532 = vpow.pop %v531
    %v533 = vadd.f32 %v530, 1.0
    %v534 = vadd.f32 %v532, 1.0
    %v535 = vrcp.pop %v533
    %v536 = vmul.f32 %v533, %v535
    %v537 = vsub.f32 1.0, %v536
    %v538 = vmul.f32 %v535, %v537
    %v539 = vadd.f32 %v535, %v538
    %vm540 = vweird.f32 %v533
    %vm541 = vweird.f32 %v535
    %vm542 = vmor %vm540, %vm541
    %v543 = vsel %vm542, %v535, %v539
    %v544 = vand.u32 2147483647, %v533
    %vm545 = vcmp.eq.f32.partialorder %v544, 8.507059e+37
    %v546 = vand.u32 %v533, 2147483648
    %v547 = vor.u32 1.1754944e-38, %v546
    %v548 = vsel %vm545, %v547, %v543
    %v549 = vmul.f32 1.0, %v548
    %v550 = vrcp.pop %v534
    %v551 = vmul.f32 %v534, %v550
    %v552 = vsub.f32 1.0, %v551
    %v553 = vmul.f32 %v550, %v552
    %v554 = vadd.f32 %v550, %v553
    %vm555 = vweird.f32 %v534
    %vm556 = vweird.f32 %v550
    %vm557 = vmor %vm555, %vm556
    %v558 = vsel %vm557, %v550, %v554
    %v559 = vand.u32 2147483647, %v534
    %vm560 = vcmp.eq.f32.partialorder %v559, 8.507059e+37
    %v561 = vand.u32 %v534, 2147483648
    %v562 = vor.u32 1.1754944e-38, %v561
    %v563 = vsel %vm560, %v562, %v558
    %v564 = vmul.f32 1.0, %v563
    %v565 = vmul.f32 %v549, 2.0
    %v566 = vmul.f32 %v564, 2.0
    %v567 = vsub.f32 %v565, 1.0
    %v568 = vsub.f32 %v566, 1.0
    %v569 = vmul.f32 %v549, %v451
    %v570 = vmul.f32 %v564, %v452
    %573 = vrot.lane.b32.xlu0 %v567, 64
    %v574 = vpop.permute.xlu0 %573
    %575 = vrot.lane.b32.xlu0 %v568, 64
    %v576 = vpop.permute.xlu0 %575
    %v579 = vmul.f32 %v549, %v574
    %v580 = vmul.f32 %v564, %v576
    %583 = vrot.lane.b32.xlu0 %v579, 32
    %v584 = vpop.permute.xlu0 %583
    %585 = vrot.lane.b32.xlu0 %v580, 32
    %v586 = vpop.permute.xlu0 %585
    %v589 = vadd.f32 %v569, %v584
    %v590 = vadd.f32 %v570, %v586
    %v591 = vtanh.pop %v589
    %v592 = vtanh.pop %v590
    %595 = vrot.lane.b32.xlu0 %v591, 64
    %v596 = vpop.permute.xlu0 %595
    %597 = vrot.lane.b32.xlu0 %v592, 64
    %v598 = vpop.permute.xlu0 %597
    %v601 = vmul.f32 %v549, %v596
    %v602 = vmul.f32 %v564, %v598
    %604 = vrot.lane.b32.xlu0 %v601, 32
    %v605 = vpop.permute.xlu0 %604
    %607 = vst.msk [vmem:[#allocation2 + $0x8] sm:$0xff] %vm217, %v605
    %609 = vrot.lane.b32.xlu0 %v602, 32
    %v610 = vpop.permute.xlu0 %609
    %612 = vst.msk [vmem:[#allocation3 + $0x30] sm:$0xff] %vm217, %v610
    %v613 = vsel %vm217, %v605, 0
    %v615 = vsel %vm217, %v610, 0
    %617 = vmatpush.msra.mxu0 0.0
    %618 = vmatpush.msra.mxu0 0.0
    %619 = vmatpush.msra.mxu0 0.0
    %620 = vmatpush.msra.mxu0 0.0
    %621 = vmatpush.msra.mxu0 0.0
    %622 = vmatpush.msra.mxu0 0.0
    %623 = vmatpush.msra.mxu0 0.0
    %624 = vmatpush.msra.mxu0 0.0
    %625 = vmatpush.msra.mxu0 0.0
    %626 = vmatpush.msra.mxu0 0.0
    %627 = vmatpush.msra.mxu0 0.0
    %628 = vmatpush.msra.mxu0 0.0
    %629 = vmatpush.msra.mxu0 %v330
    %630 = vmatpush.msra.mxu0 %v328
    %631 = vmatpush.msra.mxu0 %v326
    %632 = vmatpush.msra.mxu0 %v324
    %633 = vmatmul.f32.gmra.mxu0 %v613
    %v634 = vpop.f32.mrf.mxu0
    %v635 = vadd.f32 0.0, %v634
    %636 = vmatmul.f32.gmra.mxu0 %v615
    %v637 = vpop.f32.mrf.mxu0
    %638 = vdwg.mxu0
    %639 = vmatpush.msra.mxu0 0.0
    %640 = vmatpush.msra.mxu0 0.0
    %641 = vmatpush.msra.mxu0 0.0
    %642 = vmatpush.msra.mxu0 0.0
    %643 = vmatpush.msra.mxu0 0.0
    %644 = vmatpush.msra.mxu0 0.0
    %645 = vmatpush.msra.mxu0 0.0
    %646 = vmatpush.msra.mxu0 0.0
    %647 = vmatpush.msra.mxu0 0.0
    %648 = vmatpush.msra.mxu0 0.0
    %649 = vmatpush.msra.mxu0 0.0
    %650 = vmatpush.msra.mxu0 0.0
    %651 = vmatpush.msra.mxu0 %v331
    %652 = vmatpush.msra.mxu0 %v329
    %653 = vmatpush.msra.mxu0 %v327
    %654 = vmatpush.msra.mxu0 %v325
    %655 = vmatmul.f32.gmra.mxu0 %v613
    %v656 = vpop.f32.mrf.mxu0
    %657 = vmatmul.f32.gmra.mxu0 %v615
    %v658 = vpop.f32.mrf.mxu0
    %v659 = vadd.f32 0.0, %v658
    %660 = vdwg.mxu0
    %v661 = vadd.f32 %v266, %v635
    %v662 = vadd.f32 %v316, %v659
    %v663 = vmul.f32 %v661, %v337
    %v664 = vmul.f32 %v662, %v337
    %v665 = vxor.u32 %v663, 2147483648
    %v666 = vxor.u32 %v664, 2147483648
    %v667 = vmul.f32 %v665, 1.442695
    %v668 = vpow.pop %v667
    %v669 = vmul.f32 %v666, 1.442695
    %v670 = vpow.pop %v669
    %v671 = vadd.f32 %v668, 1.0
    %v672 = vadd.f32 %v670, 1.0
    %v673 = vrcp.pop %v671
    %v674 = vmul.f32 %v671, %v673
    %v675 = vsub.f32 1.0, %v674
    %v676 = vmul.f32 %v673, %v675
    %v677 = vadd.f32 %v673, %v676
    %vm678 = vweird.f32 %v671
    %vm679 = vweird.f32 %v673
    %vm680 = vmor %vm678, %vm679
    %v681 = vsel %vm680, %v673, %v677
    %v682 = vand.u32 2147483647, %v671
    %vm683 = vcmp.eq.f32.partialorder %v682, 8.507059e+37
    %v684 = vand.u32 %v671, 2147483648
    %v685 = vor.u32 1.1754944e-38, %v684
    %v686 = vsel %vm683, %v685, %v681
    %v687 = vmul.f32 1.0, %v686
    %v688 = vrcp.pop %v672
    %v689 = vmul.f32 %v672, %v688
    %v690 = vsub.f32 1.0, %v689
    %v691 = vmul.f32 %v688, %v690
    %v692 = vadd.f32 %v688, %v691
    %vm693 = vweird.f32 %v672
    %vm694 = vweird.f32 %v688
    %vm695 = vmor %vm693, %vm694
    %v696 = vsel %vm695, %v688, %v692
    %v697 = vand.u32 2147483647, %v672
    %vm698 = vcmp.eq.f32.partialorder %v697, 8.507059e+37
    %v699 = vand.u32 %v672, 2147483648
    %v700 = vor.u32 1.1754944e-38, %v699
    %v701 = vsel %vm698, %v700, %v696
    %v702 = vmul.f32 1.0, %v701
    %v703 = vmul.f32 %v687, 2.0
    %v704 = vmul.f32 %v702, 2.0
    %v705 = vsub.f32 %v703, 1.0
    %v706 = vsub.f32 %v704, 1.0
    %v707 = vmul.f32 %v687, %v589
    %v708 = vmul.f32 %v702, %v590
    %711 = vrot.lane.b32.xlu0 %v705, 64
    %v712 = vpop.permute.xlu0 %711
    %713 = vrot.lane.b32.xlu0 %v706, 64
    %v714 = vpop.permute.xlu0 %713
    %v717 = vmul.f32 %v687, %v712
    %v718 = vmul.f32 %v702, %v714
    %721 = vrot.lane.b32.xlu0 %v717, 32
    %v722 = vpop.permute.xlu0 %721
    %723 = vrot.lane.b32.xlu0 %v718, 32
    %v724 = vpop.permute.xlu0 %723
    %v727 = vadd.f32 %v707, %v722
    %v728 = vadd.f32 %v708, %v724
    %v729 = vtanh.pop %v727
    %v730 = vtanh.pop %v728
    %733 = vrot.lane.b32.xlu0 %v729, 64
    %v734 = vpop.permute.xlu0 %733
    %735 = vrot.lane.b32.xlu0 %v730, 64
    %v736 = vpop.permute.xlu0 %735
    %v739 = vmul.f32 %v687, %v734
    %v740 = vmul.f32 %v702, %v736
    %742 = vrot.lane.b32.xlu0 %v739, 32
    %v743 = vpop.permute.xlu0 %742
    %745 = vst.msk [vmem:[#allocation2 + $0x10] sm:$0xff] %vm217, %v743
    %747 = vrot.lane.b32.xlu0 %v740, 32
    %v748 = vpop.permute.xlu0 %747
    %750 = vst.msk [vmem:[#allocation3 + $0x28] sm:$0xff] %vm217, %v748
    %v751 = vsel %vm217, %v743, 0
    %v753 = vsel %vm217, %v748, 0
    %755 = vmatpush.msra.mxu0 0.0
    %756 = vmatpush.msra.mxu0 0.0
    %757 = vmatpush.msra.mxu0 0.0
    %758 = vmatpush.msra.mxu0 0.0
    %759 = vmatpush.msra.mxu0 0.0
    %760 = vmatpush.msra.mxu0 0.0
    %761 = vmatpush.msra.mxu0 0.0
    %762 = vmatpush.msra.mxu0 0.0
    %763 = vmatpush.msra.mxu0 0.0
    %764 = vmatpush.msra.mxu0 0.0
    %765 = vmatpush.msra.mxu0 0.0
    %766 = vmatpush.msra.mxu0 0.0
    %767 = vmatpush.msra.mxu0 %v330
    %768 = vmatpush.msra.mxu0 %v328
    %769 = vmatpush.msra.mxu0 %v326
    %770 = vmatpush.msra.mxu0 %v324
    %771 = vmatmul.f32.gmra.mxu0 %v751
    %v772 = vpop.f32.mrf.mxu0
    %v773 = vadd.f32 0.0, %v772
    %774 = vmatmul.f32.gmra.mxu0 %v753
    %v775 = vpop.f32.mrf.mxu0
    %776 = vdwg.mxu0
    %777 = vmatpush.msra.mxu0 0.0
    %778 = vmatpush.msra.mxu0 0.0
    %779 = vmatpush.msra.mxu0 0.0
    %780 = vmatpush.msra.mxu0 0.0
    %781 = vmatpush.msra.mxu0 0.0
    %782 = vmatpush.msra.mxu0 0.0
    %783 = vmatpush.msra.mxu0 0.0
    %784 = vmatpush.msra.mxu0 0.0
    %785 = vmatpush.msra.mxu0 0.0
    %786 = vmatpush.msra.mxu0 0.0
    %787 = vmatpush.msra.mxu0 0.0
    %788 = vmatpush.msra.mxu0 0.0
    %789 = vmatpush.msra.mxu0 %v331
    %790 = vmatpush.msra.mxu0 %v329
    %791 = vmatpush.msra.mxu0 %v327
    %792 = vmatpush.msra.mxu0 %v325
    %793 = vmatmul.f32.gmra.mxu0 %v751
    %v794 = vpop.f32.mrf.mxu0
    %795 = vmatmul.f32.gmra.mxu0 %v753
    %v796 = vpop.f32.mrf.mxu0
    %v797 = vadd.f32 0.0, %v796
    %798 = vdwg.mxu0
    %v799 = vadd.f32 %v269, %v773
    %v800 = vadd.f32 %v313, %v797
    %v801 = vmul.f32 %v799, %v337
    %v802 = vmul.f32 %v800, %v337
    %v803 = vxor.u32 %v801, 2147483648
    %v804 = vxor.u32 %v802, 2147483648
    %v805 = vmul.f32 %v803, 1.442695
    %v806 = vpow.pop %v805
    %v807 = vmul.f32 %v804, 1.442695
    %v808 = vpow.pop %v807
    %v809 = vadd.f32 %v806, 1.0
    %v810 = vadd.f32 %v808, 1.0
    %v811 = vrcp.pop %v809
    %v812 = vmul.f32 %v809, %v811
    %v813 = vsub.f32 1.0, %v812
    %v814 = vmul.f32 %v811, %v813
    %v815 = vadd.f32 %v811, %v814
    %vm816 = vweird.f32 %v809
    %vm817 = vweird.f32 %v811
    %vm818 = vmor %vm816, %vm817
    %v819 = vsel %vm818, %v811, %v815
    %v820 = vand.u32 2147483647, %v809
    %vm821 = vcmp.eq.f32.partialorder %v820, 8.507059e+37
    %v822 = vand.u32 %v809, 2147483648
    %v823 = vor.u32 1.1754944e-38, %v822
    %v824 = vsel %vm821, %v823, %v819
    %v825 = vmul.f32 1.0, %v824
    %v826 = vrcp.pop %v810
    %v827 = vmul.f32 %v810, %v826
    %v828 = vsub.f32 1.0, %v827
    %v829 = vmul.f32 %v826, %v828
    %v830 = vadd.f32 %v826, %v829
    %vm831 = vweird.f32 %v810
    %vm832 = vweird.f32 %v826
    %vm833 = vmor %vm831, %vm832
    %v834 = vsel %vm833, %v826, %v830
    %v835 = vand.u32 2147483647, %v810
    %vm836 = vcmp.eq.f32.partialorder %v835, 8.507059e+37
    %v837 = vand.u32 %v810, 2147483648
    %v838 = vor.u32 1.1754944e-38, %v837
    %v839 = vsel %vm836, %v838, %v834
    %v840 = vmul.f32 1.0, %v839
    %v841 = vmul.f32 %v825, 2.0
    %v842 = vmul.f32 %v840, 2.0
    %v843 = vsub.f32 %v841, 1.0
    %v844 = vsub.f32 %v842, 1.0
    %v845 = vmul.f32 %v825, %v727
    %v846 = vmul.f32 %v840, %v728
    %849 = vrot.lane.b32.xlu0 %v843, 64
    %v850 = vpop.permute.xlu0 %849
    %851 = vrot.lane.b32.xlu0 %v844, 64
    %v852 = vpop.permute.xlu0 %851
    %v855 = vmul.f32 %v825, %v850
    %v856 = vmul.f32 %v840, %v852
    %859 = vrot.lane.b32.xlu0 %v855, 32
    %v860 = vpop.permute.xlu0 %859
    %861 = vrot.lane.b32.xlu0 %v856, 32
    %v862 = vpop.permute.xlu0 %861
    %v865 = vadd.f32 %v845, %v860
    %v866 = vadd.f32 %v846, %v862
    %v867 = vtanh.pop %v865
    %v868 = vtanh.pop %v866
    %871 = vrot.lane.b32.xlu0 %v867, 64
    %v872 = vpop.permute.xlu0 %871
    %873 = vrot.lane.b32.xlu0 %v868, 64
    %v874 = vpop.permute.xlu0 %873
    %v877 = vmul.f32 %v825, %v872
    %v878 = vmul.f32 %v840, %v874
    %880 = vrot.lane.b32.xlu0 %v877, 32
    %v881 = vpop.permute.xlu0 %880
    %883 = vst.msk [vmem:[#allocation2 + $0x18] sm:$0xff] %vm217, %v881
    %885 = vrot.lane.b32.xlu0 %v878, 32
    %v886 = vpop.permute.xlu0 %885
    %888 = vst.msk [vmem:[#allocation3 + $0x20] sm:$0xff] %vm217, %v886
    %v889 = vsel %vm217, %v881, 0
    %v891 = vsel %vm217, %v886, 0
    %893 = vmatpush.msra.mxu0 0.0
    %894 = vmatpush.msra.mxu0 0.0
    %895 = vmatpush.msra.mxu0 0.0
    %896 = vmatpush.msra.mxu0 0.0
    %897 = vmatpush.msra.mxu0 0.0
    %898 = vmatpush.msra.mxu0 0.0
    %899 = vmatpush.msra.mxu0 0.0
    %900 = vmatpush.msra.mxu0 0.0
    %901 = vmatpush.msra.mxu0 0.0
    %902 = vmatpush.msra.mxu0 0.0
    %903 = vmatpush.msra.mxu0 0.0
    %904 = vmatpush.msra.mxu0 0.0
    %905 = vmatpush.msra.mxu0 %v330
    %906 = vmatpush.msra.mxu0 %v328
    %907 = vmatpush.msra.mxu0 %v326
    %908 = vmatpush.msra.mxu0 %v324
    %909 = vmatmul.f32.gmra.mxu0 %v889
    %v910 = vpop.f32.mrf.mxu0
    %v911 = vadd.f32 0.0, %v910
    %912 = vmatmul.f32.gmra.mxu0 %v891
    %v913 = vpop.f32.mrf.mxu0
    %914 = vdwg.mxu0
    %915 = vmatpush.msra.mxu0 0.0
    %916 = vmatpush.msra.mxu0 0.0
    %917 = vmatpush.msra.mxu0 0.0
    %918 = vmatpush.msra.mxu0 0.0
    %919 = vmatpush.msra.mxu0 0.0
    %920 = vmatpush.msra.mxu0 0.0
    %921 = vmatpush.msra.mxu0 0.0
    %922 = vmatpush.msra.mxu0 0.0
    %923 = vmatpush.msra.mxu0 0.0
    %924 = vmatpush.msra.mxu0 0.0
    %925 = vmatpush.msra.mxu0 0.0
    %926 = vmatpush.msra.mxu0 0.0
    %927 = vmatpush.msra.mxu0 %v331
    %928 = vmatpush.msra.mxu0 %v329
    %929 = vmatpush.msra.mxu0 %v327
    %930 = vmatpush.msra.mxu0 %v325
    %931 = vmatmul.f32.gmra.mxu0 %v889
    %v932 = vpop.f32.mrf.mxu0
    %933 = vmatmul.f32.gmra.mxu0 %v891
    %v934 = vpop.f32.mrf.mxu0
    %v935 = vadd.f32 0.0, %v934
    %936 = vdwg.mxu0
    %v937 = vadd.f32 %v272, %v911
    %v938 = vadd.f32 %v310, %v935
    %v939 = vmul.f32 %v937, %v337
    %v940 = vmul.f32 %v938, %v337
    %v941 = vxor.u32 %v939, 2147483648
    %v942 = vxor.u32 %v940, 2147483648
    %v943 = vmul.f32 %v941, 1.442695
    %v944 = vpow.pop %v943
    %v945 = vmul.f32 %v942, 1.442695
    %v946 = vpow.pop %v945
    %v947 = vadd.f32 %v944, 1.0
    %v948 = vadd.f32 %v946, 1.0
    %v949 = vrcp.pop %v947
    %v950 = vmul.f32 %v947, %v949
    %v951 = vsub.f32 1.0, %v950
    %v952 = vmul.f32 %v949, %v951
    %v953 = vadd.f32 %v949, %v952
    %vm954 = vweird.f32 %v947
    %vm955 = vweird.f32 %v949
    %vm956 = vmor %vm954, %vm955
    %v957 = vsel %vm956, %v949, %v953
    %v958 = vand.u32 2147483647, %v947
    %vm959 = vcmp.eq.f32.partialorder %v958, 8.507059e+37
    %v960 = vand.u32 %v947, 2147483648
    %v961 = vor.u32 1.1754944e-38, %v960
    %v962 = vsel %vm959, %v961, %v957
    %v963 = vmul.f32 1.0, %v962
    %v964 = vrcp.pop %v948
    %v965 = vmul.f32 %v948, %v964
    %v966 = vsub.f32 1.0, %v965
    %v967 = vmul.f32 %v964, %v966
    %v968 = vadd.f32 %v964, %v967
    %vm969 = vweird.f32 %v948
    %vm970 = vweird.f32 %v964
    %vm971 = vmor %vm969, %vm970
    %v972 = vsel %vm971, %v964, %v968
    %v973 = vand.u32 2147483647, %v948
    %vm974 = vcmp.eq.f32.partialorder %v973, 8.507059e+37
    %v975 = vand.u32 %v948, 2147483648
    %v976 = vor.u32 1.1754944e-38, %v975
    %v977 = vsel %vm974, %v976, %v972
    %v978 = vmul.f32 1.0, %v977
    %v979 = vmul.f32 %v963, 2.0
    %v980 = vmul.f32 %v978, 2.0
    %v981 = vsub.f32 %v979, 1.0
    %v982 = vsub.f32 %v980, 1.0
    %v983 = vmul.f32 %v963, %v865
    %v984 = vmul.f32 %v978, %v866
    %987 = vrot.lane.b32.xlu0 %v981, 64
    %v988 = vpop.permute.xlu0 %987
    %989 = vrot.lane.b32.xlu0 %v982, 64
    %v990 = vpop.permute.xlu0 %989
    %v993 = vmul.f32 %v963, %v988
    %v994 = vmul.f32 %v978, %v990
    %997 = vrot.lane.b32.xlu0 %v993, 32
    %v998 = vpop.permute.xlu0 %997
    %999 = vrot.lane.b32.xlu0 %v994, 32
    %v1000 = vpop.permute.xlu0 %999
    %v1003 = vadd.f32 %v983, %v998
    %v1004 = vadd.f32 %v984, %v1000
    %v1005 = vtanh.pop %v1003
    %v1006 = vtanh.pop %v1004
    %1009 = vrot.lane.b32.xlu0 %v1005, 64
    %v1010 = vpop.permute.xlu0 %1009
    %1011 = vrot.lane.b32.xlu0 %v1006, 64
    %v1012 = vpop.permute.xlu0 %1011
    %v1015 = vmul.f32 %v963, %v1010
    %v1016 = vmul.f32 %v978, %v1012
    %1018 = vrot.lane.b32.xlu0 %v1015, 32
    %v1019 = vpop.permute.xlu0 %1018
    %1021 = vst.msk [vmem:[#allocation2 + $0x20] sm:$0xff] %vm217, %v1019
    %1023 = vrot.lane.b32.xlu0 %v1016, 32
    %v1024 = vpop.permute.xlu0 %1023
    %1026 = vst.msk [vmem:[#allocation3 + $0x18] sm:$0xff] %vm217, %v1024
    %v1027 = vsel %vm217, %v1019, 0
    %v1029 = vsel %vm217, %v1024, 0
    %1031 = vmatpush.msra.mxu0 0.0
    %1032 = vmatpush.msra.mxu0 0.0
    %1033 = vmatpush.msra.mxu0 0.0
    %1034 = vmatpush.msra.mxu0 0.0
    %1035 = vmatpush.msra.mxu0 0.0
    %1036 = vmatpush.msra.mxu0 0.0
    %1037 = vmatpush.msra.mxu0 0.0
    %1038 = vmatpush.msra.mxu0 0.0
    %1039 = vmatpush.msra.mxu0 0.0
    %1040 = vmatpush.msra.mxu0 0.0
    %1041 = vmatpush.msra.mxu0 0.0
    %1042 = vmatpush.msra.mxu0 0.0
    %1043 = vmatpush.msra.mxu0 %v330
    %1044 = vmatpush.msra.mxu0 %v328
    %1045 = vmatpush.msra.mxu0 %v326
    %1046 = vmatpush.msra.mxu0 %v324
    %1047 = vmatmul.f32.gmra.mxu0 %v1027
    %v1048 = vpop.f32.mrf.mxu0
    %v1049 = vadd.f32 0.0, %v1048
    %1050 = vmatmul.f32.gmra.mxu0 %v1029
    %v1051 = vpop.f32.mrf.mxu0
    %1052 = vdwg.mxu0
    %1053 = vmatpush.msra.mxu0 0.0
    %1054 = vmatpush.msra.mxu0 0.0
    %1055 = vmatpush.msra.mxu0 0.0
    %1056 = vmatpush.msra.mxu0 0.0
    %1057 = vmatpush.msra.mxu0 0.0
    %1058 = vmatpush.msra.mxu0 0.0
    %1059 = vmatpush.msra.mxu0 0.0
    %1060 = vmatpush.msra.mxu0 0.0
    %1061 = vmatpush.msra.mxu0 0.0
    %1062 = vmatpush.msra.mxu0 0.0
    %1063 = vmatpush.msra.mxu0 0.0
    %1064 = vmatpush.msra.mxu0 0.0
    %1065 = vmatpush.msra.mxu0 %v331
    %1066 = vmatpush.msra.mxu0 %v329
    %1067 = vmatpush.msra.mxu0 %v327
    %1068 = vmatpush.msra.mxu0 %v325
    %1069 = vmatmul.f32.gmra.mxu0 %v1027
    %v1070 = vpop.f32.mrf.mxu0
    %1071 = vmatmul.f32.gmra.mxu0 %v1029
    %v1072 = vpop.f32.mrf.mxu0
    %v1073 = vadd.f32 0.0, %v1072
    %1074 = vdwg.mxu0
    %v1075 = vadd.f32 %v275, %v1049
    %v1076 = vadd.f32 %v307, %v1073
    %v1077 = vmul.f32 %v1075, %v337
    %v1078 = vmul.f32 %v1076, %v337
    %v1079 = vxor.u32 %v1077, 2147483648
    %v1080 = vxor.u32 %v1078, 2147483648
    %v1081 = vmul.f32 %v1079, 1.442695
    %v1082 = vpow.pop %v1081
    %v1083 = vmul.f32 %v1080, 1.442695
    %v1084 = vpow.pop %v1083
    %v1085 = vadd.f32 %v1082, 1.0
    %v1086 = vadd.f32 %v1084, 1.0
    %v1087 = vrcp.pop %v1085
    %v1088 = vmul.f32 %v1085, %v1087
    %v1089 = vsub.f32 1.0, %v1088
    %v1090 = vmul.f32 %v1087, %v1089
    %v1091 = vadd.f32 %v1087, %v1090
    %vm1092 = vweird.f32 %v1085
    %vm1093 = vweird.f32 %v1087
    %vm1094 = vmor %vm1092, %vm1093
    %v1095 = vsel %vm1094, %v1087, %v1091
    %v1096 = vand.u32 2147483647, %v1085
    %vm1097 = vcmp.eq.f32.partialorder %v1096, 8.507059e+37
    %v1098 = vand.u32 %v1085, 2147483648
    %v1099 = vor.u32 1.1754944e-38, %v1098
    %v1100 = vsel %vm1097, %v1099, %v1095
    %v1101 = vmul.f32 1.0, %v1100
    %v1102 = vrcp.pop %v1086
    %v1103 = vmul.f32 %v1086, %v1102
    %v1104 = vsub.f32 1.0, %v1103
    %v1105 = vmul.f32 %v1102, %v1104
    %v1106 = vadd.f32 %v1102, %v1105
    %vm1107 = vweird.f32 %v1086
    %vm1108 = vweird.f32 %v1102
    %vm1109 = vmor %vm1107, %vm1108
    %v1110 = vsel %vm1109, %v1102, %v1106
    %v1111 = vand.u32 2147483647, %v1086
    %vm1112 = vcmp.eq.f32.partialorder %v1111, 8.507059e+37
    %v1113 = vand.u32 %v1086, 2147483648
    %v1114 = vor.u32 1.1754944e-38, %v1113
    %v1115 = vsel %vm1112, %v1114, %v1110
    %v1116 = vmul.f32 1.0, %v1115
    %v1117 = vmul.f32 %v1101, 2.0
    %v1118 = vmul.f32 %v1116, 2.0
    %v1119 = vsub.f32 %v1117, 1.0
    %v1120 = vsub.f32 %v1118, 1.0
    %v1121 = vmul.f32 %v1101, %v1003
    %v1122 = vmul.f32 %v1116, %v1004
    %1125 = vrot.lane.b32.xlu0 %v1119, 64
    %v1126 = vpop.permute.xlu0 %1125
    %1127 = vrot.lane.b32.xlu0 %v1120, 64
    %v1128 = vpop.permute.xlu0 %1127
    %v1131 = vmul.f32 %v1101, %v1126
    %v1132 = vmul.f32 %v1116, %v1128
    %1135 = vrot.lane.b32.xlu0 %v1131, 32
    %v1136 = vpop.permute.xlu0 %1135
    %1137 = vrot.lane.b32.xlu0 %v1132, 32
    %v1138 = vpop.permute.xlu0 %1137
    %v1141 = vadd.f32 %v1121, %v1136
    %v1142 = vadd.f32 %v1122, %v1138
    %v1143 = vtanh.pop %v1141
    %v1144 = vtanh.pop %v1142
    %1147 = vrot.lane.b32.xlu0 %v1143, 64
    %v1148 = vpop.permute.xlu0 %1147
    %1149 = vrot.lane.b32.xlu0 %v1144, 64
    %v1150 = vpop.permute.xlu0 %1149
    %v1153 = vmul.f32 %v1101, %v1148
    %v1154 = vmul.f32 %v1116, %v1150
    %1156 = vrot.lane.b32.xlu0 %v1153, 32
    %v1157 = vpop.permute.xlu0 %1156
    %1159 = vst.msk [vmem:[#allocation2 + $0x28] sm:$0xff] %vm217, %v1157
    %1161 = vrot.lane.b32.xlu0 %v1154, 32
    %v1162 = vpop.permute.xlu0 %1161
    %1164 = vst.msk [vmem:[#allocation3 + $0x10] sm:$0xff] %vm217, %v1162
    %v1165 = vsel %vm217, %v1157, 0
    %v1167 = vsel %vm217, %v1162, 0
    %1169 = vmatpush.msra.mxu0 0.0
    %1170 = vmatpush.msra.mxu0 0.0
    %1171 = vmatpush.msra.mxu0 0.0
    %1172 = vmatpush.msra.mxu0 0.0
    %1173 = vmatpush.msra.mxu0 0.0
    %1174 = vmatpush.msra.mxu0 0.0
    %1175 = vmatpush.msra.mxu0 0.0
    %1176 = vmatpush.msra.mxu0 0.0
    %1177 = vmatpush.msra.mxu0 0.0
    %1178 = vmatpush.msra.mxu0 0.0
    %1179 = vmatpush.msra.mxu0 0.0
    %1180 = vmatpush.msra.mxu0 0.0
    %1181 = vmatpush.msra.mxu0 %v330
    %1182 = vmatpush.msra.mxu0 %v328
    %1183 = vmatpush.msra.mxu0 %v326
    %1184 = vmatpush.msra.mxu0 %v324
    %1185 = vmatmul.f32.gmra.mxu0 %v1165
    %v1186 = vpop.f32.mrf.mxu0
    %v1187 = vadd.f32 0.0, %v1186
    %1188 = vmatmul.f32.gmra.mxu0 %v1167
    %v1189 = vpop.f32.mrf.mxu0
    %1190 = vdwg.mxu0
    %1191 = vmatpush.msra.mxu0 0.0
    %1192 = vmatpush.msra.mxu0 0.0
    %1193 = vmatpush.msra.mxu0 0.0
    %1194 = vmatpush.msra.mxu0 0.0
    %1195 = vmatpush.msra.mxu0 0.0
    %1196 = vmatpush.msra.mxu0 0.0
    %1197 = vmatpush.msra.mxu0 0.0
    %1198 = vmatpush.msra.mxu0 0.0
    %1199 = vmatpush.msra.mxu0 0.0
    %1200 = vmatpush.msra.mxu0 0.0
    %1201 = vmatpush.msra.mxu0 0.0
    %1202 = vmatpush.msra.mxu0 0.0
    %1203 = vmatpush.msra.mxu0 %v331
    %1204 = vmatpush.msra.mxu0 %v329
    %1205 = vmatpush.msra.mxu0 %v327
    %1206 = vmatpush.msra.mxu0 %v325
    %1207 = vmatmul.f32.gmra.mxu0 %v1165
    %v1208 = vpop.f32.mrf.mxu0
    %1209 = vmatmul.f32.gmra.mxu0 %v1167
    %v1210 = vpop.f32.mrf.mxu0
    %v1211 = vadd.f32 0.0, %v1210
    %1212 = vdwg.mxu0
    %v1213 = vadd.f32 %v278, %v1187
    %v1214 = vadd.f32 %v304, %v1211
    %v1215 = vmul.f32 %v1213, %v337
    %v1216 = vmul.f32 %v1214, %v337
    %v1217 = vxor.u32 %v1215, 2147483648
    %v1218 = vxor.u32 %v1216, 2147483648
    %v1219 = vmul.f32 %v1217, 1.442695
    %v1220 = vpow.pop %v1219
    %v1221 = vmul.f32 %v1218, 1.442695
    %v1222 = vpow.pop %v1221
    %v1223 = vadd.f32 %v1220, 1.0
    %v1224 = vadd.f32 %v1222, 1.0
    %v1225 = vrcp.pop %v1223
    %v1226 = vmul.f32 %v1223, %v1225
    %v1227 = vsub.f32 1.0, %v1226
    %v1228 = vmul.f32 %v1225, %v1227
    %v1229 = vadd.f32 %v1225, %v1228
    %vm1230 = vweird.f32 %v1223
    %vm1231 = vweird.f32 %v1225
    %vm1232 = vmor %vm1230, %vm1231
    %v1233 = vsel %vm1232, %v1225, %v1229
    %v1234 = vand.u32 2147483647, %v1223
    %vm1235 = vcmp.eq.f32.partialorder %v1234, 8.507059e+37
    %v1236 = vand.u32 %v1223, 2147483648
    %v1237 = vor.u32 1.1754944e-38, %v1236
    %v1238 = vsel %vm1235, %v1237, %v1233
    %v1239 = vmul.f32 1.0, %v1238
    %v1240 = vrcp.pop %v1224
    %v1241 = vmul.f32 %v1224, %v1240
    %v1242 = vsub.f32 1.0, %v1241
    %v1243 = vmul.f32 %v1240, %v1242
    %v1244 = vadd.f32 %v1240, %v1243
    %vm1245 = vweird.f32 %v1224
    %vm1246 = vweird.f32 %v1240
    %vm1247 = vmor %vm1245, %vm1246
    %v1248 = vsel %vm1247, %v1240, %v1244
    %v1249 = vand.u32 2147483647, %v1224
    %vm1250 = vcmp.eq.f32.partialorder %v1249, 8.507059e+37
    %v1251 = vand.u32 %v1224, 2147483648
    %v1252 = vor.u32 1.1754944e-38, %v1251
    %v1253 = vsel %vm1250, %v1252, %v1248
    %v1254 = vmul.f32 1.0, %v1253
    %v1255 = vmul.f32 %v1239, 2.0
    %v1256 = vmul.f32 %v1254, 2.0
    %v1257 = vsub.f32 %v1255, 1.0
    %v1258 = vsub.f32 %v1256, 1.0
    %v1259 = vmul.f32 %v1239, %v1141
    %v1260 = vmul.f32 %v1254, %v1142
    %1263 = vrot.lane.b32.xlu0 %v1257, 64
    %v1264 = vpop.permute.xlu0 %1263
    %1265 = vrot.lane.b32.xlu0 %v1258, 64
    %v1266 = vpop.permute.xlu0 %1265
    %v1269 = vmul.f32 %v1239, %v1264
    %v1270 = vmul.f32 %v1254, %v1266
    %1273 = vrot.lane.b32.xlu0 %v1269, 32
    %v1274 = vpop.permute.xlu0 %1273
    %1275 = vrot.lane.b32.xlu0 %v1270, 32
    %v1276 = vpop.permute.xlu0 %1275
    %v1279 = vadd.f32 %v1259, %v1274
    %v1280 = vadd.f32 %v1260, %v1276
    %v1281 = vtanh.pop %v1279
    %v1282 = vtanh.pop %v1280
    %1285 = vrot.lane.b32.xlu0 %v1281, 64
    %v1286 = vpop.permute.xlu0 %1285
    %1287 = vrot.lane.b32.xlu0 %v1282, 64
    %v1288 = vpop.permute.xlu0 %1287
    %v1291 = vmul.f32 %v1239, %v1286
    %v1292 = vmul.f32 %v1254, %v1288
    %1294 = vrot.lane.b32.xlu0 %v1291, 32
    %v1295 = vpop.permute.xlu0 %1294
    %1297 = vst.msk [vmem:[#allocation2 + $0x30] sm:$0xff] %vm217, %v1295
    %1299 = vrot.lane.b32.xlu0 %v1292, 32
    %v1300 = vpop.permute.xlu0 %1299
    %1302 = vst.msk [vmem:[#allocation3 + $0x8] sm:$0xff] %vm217, %v1300
    %v1303 = vsel %vm217, %v1295, 0
    %v1305 = vsel %vm217, %v1300, 0
    %1307 = vmatpush.msra.mxu0 0.0
    %1308 = vmatpush.msra.mxu0 0.0
    %1309 = vmatpush.msra.mxu0 0.0
    %1310 = vmatpush.msra.mxu0 0.0
    %1311 = vmatpush.msra.mxu0 0.0
    %1312 = vmatpush.msra.mxu0 0.0
    %1313 = vmatpush.msra.mxu0 0.0
    %1314 = vmatpush.msra.mxu0 0.0
    %1315 = vmatpush.msra.mxu0 0.0
    %1316 = vmatpush.msra.mxu0 0.0
    %1317 = vmatpush.msra.mxu0 0.0
    %1318 = vmatpush.msra.mxu0 0.0
    %1319 = vmatpush.msra.mxu0 %v330
    %1320 = vmatpush.msra.mxu0 %v328
    %1321 = vmatpush.msra.mxu0 %v326
    %1322 = vmatpush.msra.mxu0 %v324
    %1323 = vmatmul.f32.gmra.mxu0 %v1303
    %v1324 = vpop.f32.mrf.mxu0
    %v1325 = vadd.f32 0.0, %v1324
    %1326 = vmatmul.f32.gmra.mxu0 %v1305
    %v1327 = vpop.f32.mrf.mxu0
    %1328 = vdwg.mxu0
    %1329 = vmatpush.msra.mxu0 0.0
    %1330 = vmatpush.msra.mxu0 0.0
    %1331 = vmatpush.msra.mxu0 0.0
    %1332 = vmatpush.msra.mxu0 0.0
    %1333 = vmatpush.msra.mxu0 0.0
    %1334 = vmatpush.msra.mxu0 0.0
    %1335 = vmatpush.msra.mxu0 0.0
    %1336 = vmatpush.msra.mxu0 0.0
    %1337 = vmatpush.msra.mxu0 0.0
    %1338 = vmatpush.msra.mxu0 0.0
    %1339 = vmatpush.msra.mxu0 0.0
    %1340 = vmatpush.msra.mxu0 0.0
    %1341 = vmatpush.msra.mxu0 %v331
    %1342 = vmatpush.msra.mxu0 %v329
    %1343 = vmatpush.msra.mxu0 %v327
    %1344 = vmatpush.msra.mxu0 %v325
    %1345 = vmatmul.f32.gmra.mxu0 %v1303
    %v1346 = vpop.f32.mrf.mxu0
    %1347 = vmatmul.f32.gmra.mxu0 %v1305
    %v1348 = vpop.f32.mrf.mxu0
    %v1349 = vadd.f32 0.0, %v1348
    %1350 = vdwg.mxu0
    %v1351 = vadd.f32 %v281, %v1325
    %v1352 = vadd.f32 %v301, %v1349
    %v1353 = vmul.f32 %v1351, %v337
    %v1354 = vmul.f32 %v1352, %v337
    %v1355 = vxor.u32 %v1353, 2147483648
    %v1356 = vxor.u32 %v1354, 2147483648
    %v1357 = vmul.f32 %v1355, 1.442695
    %v1358 = vpow.pop %v1357
    %v1359 = vmul.f32 %v1356, 1.442695
    %v1360 = vpow.pop %v1359
    %v1361 = vadd.f32 %v1358, 1.0
    %v1362 = vadd.f32 %v1360, 1.0
    %v1363 = vrcp.pop %v1361
    %v1364 = vmul.f32 %v1361, %v1363
    %v1365 = vsub.f32 1.0, %v1364
    %v1366 = vmul.f32 %v1363, %v1365
    %v1367 = vadd.f32 %v1363, %v1366
    %vm1368 = vweird.f32 %v1361
    %vm1369 = vweird.f32 %v1363
    %vm1370 = vmor %vm1368, %vm1369
    %v1371 = vsel %vm1370, %v1363, %v1367
    %v1372 = vand.u32 2147483647, %v1361
    %vm1373 = vcmp.eq.f32.partialorder %v1372, 8.507059e+37
    %v1374 = vand.u32 %v1361, 2147483648
    %v1375 = vor.u32 1.1754944e-38, %v1374
    %v1376 = vsel %vm1373, %v1375, %v1371
    %v1377 = vmul.f32 1.0, %v1376
    %v1378 = vrcp.pop %v1362
    %v1379 = vmul.f32 %v1362, %v1378
    %v1380 = vsub.f32 1.0, %v1379
    %v1381 = vmul.f32 %v1378, %v1380
    %v1382 = vadd.f32 %v1378, %v1381
    %vm1383 = vweird.f32 %v1362
    %vm1384 = vweird.f32 %v1378
    %vm1385 = vmor %vm1383, %vm1384
    %v1386 = vsel %vm1385, %v1378, %v1382
    %v1387 = vand.u32 2147483647, %v1362
    %vm1388 = vcmp.eq.f32.partialorder %v1387, 8.507059e+37
    %v1389 = vand.u32 %v1362, 2147483648
    %v1390 = vor.u32 1.1754944e-38, %v1389
    %v1391 = vsel %vm1388, %v1390, %v1386
    %v1392 = vmul.f32 1.0, %v1391
    %v1393 = vmul.f32 %v1377, 2.0
    %v1394 = vmul.f32 %v1392, 2.0
    %v1395 = vsub.f32 %v1393, 1.0
    %v1396 = vsub.f32 %v1394, 1.0
    %v1397 = vmul.f32 %v1377, %v1279
    %v1398 = vmul.f32 %v1392, %v1280
    %1401 = vrot.lane.b32.xlu0 %v1395, 64
    %v1402 = vpop.permute.xlu0 %1401
    %1403 = vrot.lane.b32.xlu0 %v1396, 64
    %v1404 = vpop.permute.xlu0 %1403
    %v1407 = vmul.f32 %v1377, %v1402
    %v1408 = vmul.f32 %v1392, %v1404
    %1411 = vrot.lane.b32.xlu0 %v1407, 32
    %v1412 = vpop.permute.xlu0 %1411
    %1413 = vrot.lane.b32.xlu0 %v1408, 32
    %v1414 = vpop.permute.xlu0 %1413
    %v1417 = vadd.f32 %v1397, %v1412
    %v1418 = vadd.f32 %v1398, %v1414
    %v1419 = vtanh.pop %v1417
    %v1420 = vtanh.pop %v1418
    %1423 = vrot.lane.b32.xlu0 %v1419, 64
    %v1424 = vpop.permute.xlu0 %1423
    %1425 = vrot.lane.b32.xlu0 %v1420, 64
    %v1426 = vpop.permute.xlu0 %1425
    %v1429 = vmul.f32 %v1377, %v1424
    %v1430 = vmul.f32 %v1392, %v1426
    %1432 = vrot.lane.b32.xlu0 %v1429, 32
    %v1433 = vpop.permute.xlu0 %1432
    %1435 = vst.msk [vmem:[#allocation2 + $0x38] sm:$0xff] %vm217, %v1433
    %1437 = vrot.lane.b32.xlu0 %v1430, 32
    %v1438 = vpop.permute.xlu0 %1437
    %1440 = vst.msk [vmem:[#allocation3] sm:$0xff] %vm217, %v1438
    %v1441 = vld [vmem:[#allocation2] sm:$0xff]
    %v1442 = vld [vmem:[#allocation2 + $0x8] sm:$0xff]
    %v1443 = vld [vmem:[#allocation2 + $0x10] sm:$0xff]
    %v1444 = vld [vmem:[#allocation2 + $0x18] sm:$0xff]
    %v1445 = vld [vmem:[#allocation2 + $0x20] sm:$0xff]
    %v1446 = vld [vmem:[#allocation2 + $0x28] sm:$0xff]
    %v1447 = vld [vmem:[#allocation2 + $0x30] sm:$0xff]
    %v1448 = vld [vmem:[#allocation2 + $0x38] sm:$0xff]
    %v1449 = vld [vmem:[#allocation3] sm:$0xff]
    %v1450 = vld [vmem:[#allocation3 + $0x8] sm:$0xff]
    %v1451 = vld [vmem:[#allocation3 + $0x10] sm:$0xff]
    %v1452 = vld [vmem:[#allocation3 + $0x18] sm:$0xff]
    %v1453 = vld [vmem:[#allocation3 + $0x20] sm:$0xff]
    %v1454 = vld [vmem:[#allocation3 + $0x28] sm:$0xff]
    %v1455 = vld [vmem:[#allocation3 + $0x30] sm:$0xff]
    %v1456 = vld [vmem:[#allocation3 + $0x38] sm:$0xff]
    %v1457 = vld [vmem:[%s6] sm:$0xff]
    %v1458 = vld [vmem:[%s6 + $0x8] sm:$0xff]
    %v1459 = vld [vmem:[%s6 + $0x10] sm:$0xff]
    %v1460 = vld [vmem:[%s6 + $0x18] sm:$0xff]
    %v1461 = vld [vmem:[#allocation10] sm:$0xff]
    %v1462 = vld [vmem:[#allocation10 + $0x8] sm:$0xff]
    %v1463 = vld [vmem:[#allocation10 + $0x10] sm:$0xff]
    %v1464 = vld [vmem:[#allocation10 + $0x18] sm:$0xff]
    %v1466 = vsel %vm217, %v1449, 0
    %v1469 = vsel %vm217, %v1450, 0
    %v1472 = vsel %vm217, %v1451, 0
    %v1475 = vsel %vm217, %v1452, 0
    %v1478 = vsel %vm217, %v1453, 0
    %v1481 = vsel %vm217, %v1454, 0
    %v1484 = vsel %vm217, %v1455, 0
    %v1487 = vsel %vm217, %v1456, 0
    %1489 = vmatpush.msra.mxu0 0.0
    %1490 = vmatpush.msra.mxu0 0.0
    %1491 = vmatpush.msra.mxu0 0.0
    %1492 = vmatpush.msra.mxu0 0.0
    %1493 = vmatpush.msra.mxu0 0.0
    %1494 = vmatpush.msra.mxu0 0.0
    %1495 = vmatpush.msra.mxu0 0.0
    %1496 = vmatpush.msra.mxu0 0.0
    %1497 = vmatpush.msra.mxu0 0.0
    %1498 = vmatpush.msra.mxu0 0.0
    %1499 = vmatpush.msra.mxu0 0.0
    %1500 = vmatpush.msra.mxu0 0.0
    %1501 = vmatpush.msra.mxu0 %v1464
    %1502 = vmatpush.msra.mxu0 %v1463
    %1503 = vmatpush.msra.mxu0 %v1462
    %1504 = vmatpush.msra.mxu0 %v1461
    %1505 = vmatmul.f32.gmra.mxu0 %v1466
    %v1506 = vpop.f32.mrf.mxu0
    %v1507 = vadd.f32 0.0, %v1506
    %1508 = vmatmul.f32.gmra.mxu0 %v1469
    %v1509 = vpop.f32.mrf.mxu0
    %v1510 = vadd.f32 0.0, %v1509
    %1511 = vmatmul.f32.gmra.mxu0 %v1472
    %v1512 = vpop.f32.mrf.mxu0
    %v1513 = vadd.f32 0.0, %v1512
    %1514 = vmatmul.f32.gmra.mxu0 %v1475
    %v1515 = vpop.f32.mrf.mxu0
    %v1516 = vadd.f32 0.0, %v1515
    %1517 = vmatmul.f32.gmra.mxu0 %v1478
    %v1518 = vpop.f32.mrf.mxu0
    %v1519 = vadd.f32 0.0, %v1518
    %1520 = vmatmul.f32.gmra.mxu0 %v1481
    %v1521 = vpop.f32.mrf.mxu0
    %v1522 = vadd.f32 0.0, %v1521
    %1523 = vmatmul.f32.gmra.mxu0 %v1484
    %v1524 = vpop.f32.mrf.mxu0
    %v1525 = vadd.f32 0.0, %v1524
    %1526 = vmatmul.f32.gmra.mxu0 %v1487
    %v1527 = vpop.f32.mrf.mxu0
    %v1528 = vadd.f32 0.0, %v1527
    %1529 = vdwg.mxu0
    %v1531 = vsel %vm217, %v1441, 0
    %v1534 = vsel %vm217, %v1442, 0
    %v1537 = vsel %vm217, %v1443, 0
    %v1540 = vsel %vm217, %v1444, 0
    %v1543 = vsel %vm217, %v1445, 0
    %v1546 = vsel %vm217, %v1446, 0
    %v1549 = vsel %vm217, %v1447, 0
    %v1552 = vsel %vm217, %v1448, 0
    %1554 = vmatpush.msra.mxu0 0.0
    %1555 = vmatpush.msra.mxu0 0.0
    %1556 = vmatpush.msra.mxu0 0.0
    %1557 = vmatpush.msra.mxu0 0.0
    %1558 = vmatpush.msra.mxu0 0.0
    %1559 = vmatpush.msra.mxu0 0.0
    %1560 = vmatpush.msra.mxu0 0.0
    %1561 = vmatpush.msra.mxu0 0.0
    %1562 = vmatpush.msra.mxu0 0.0
    %1563 = vmatpush.msra.mxu0 0.0
    %1564 = vmatpush.msra.mxu0 0.0
    %1565 = vmatpush.msra.mxu0 0.0
    %1566 = vmatpush.msra.mxu0 %v1460
    %1567 = vmatpush.msra.mxu0 %v1459
    %1568 = vmatpush.msra.mxu0 %v1458
    %1569 = vmatpush.msra.mxu0 %v1457
    %1570 = vmatmul.f32.gmra.mxu0 %v1531
    %v1571 = vpop.f32.mrf.mxu0
    %v1572 = vadd.f32 %v1507, %v1571
    %1573 = vmatmul.f32.gmra.mxu0 %v1534
    %v1574 = vpop.f32.mrf.mxu0
    %v1575 = vadd.f32 %v1510, %v1574
    %1576 = vmatmul.f32.gmra.mxu0 %v1537
    %v1577 = vpop.f32.mrf.mxu0
    %v1578 = vadd.f32 %v1513, %v1577
    %1579 = vmatmul.f32.gmra.mxu0 %v1540
    %v1580 = vpop.f32.mrf.mxu0
    %v1581 = vadd.f32 %v1516, %v1580
    %1582 = vmatmul.f32.gmra.mxu0 %v1543
    %v1583 = vpop.f32.mrf.mxu0
    %v1584 = vadd.f32 %v1519, %v1583
    %1585 = vmatmul.f32.gmra.mxu0 %v1546
    %v1586 = vpop.f32.mrf.mxu0
    %v1587 = vadd.f32 %v1522, %v1586
    %1588 = vmatmul.f32.gmra.mxu0 %v1549
    %v1589 = vpop.f32.mrf.mxu0
    %v1590 = vadd.f32 %v1525, %v1589
    %1591 = vmatmul.f32.gmra.mxu0 %v1552
    %v1592 = vpop.f32.mrf.mxu0
    %v1593 = vadd.f32 %v1528, %v1592
    %1594 = vdwg.mxu0
    %v1595 = vld [vmem:[%s8] sm:$0x1]
    %v1597 = vperm.slane %v1595, 0
    %v1599 = vadd.f32 %v1572, %v1597
    %v1600 = vadd.f32 %v1575, %v1597
    %v1601 = vadd.f32 %v1578, %v1597
    %v1602 = vadd.f32 %v1581, %v1597
    %v1603 = vadd.f32 %v1584, %v1597
    %v1604 = vadd.f32 %v1587, %v1597
    %v1605 = vadd.f32 %v1590, %v1597
    %v1606 = vadd.f32 %v1593, %v1597
    %v1607 = vtanh.pop %v1599
    %v1608 = vtanh.pop %v1600
    %v1609 = vtanh.pop %v1601
    %v1610 = vtanh.pop %v1602
    %v1611 = vtanh.pop %v1603
    %v1612 = vtanh.pop %v1604
    %v1613 = vtanh.pop %v1605
    %v1614 = vtanh.pop %v1606
    %v1615 = vld [vmem:[%s9] sm:$0xff]
    %v1616 = vld [vmem:[%s9 + $0x8] sm:$0xff]
    %v1617 = vld [vmem:[%s9 + $0x10] sm:$0xff]
    %v1618 = vld [vmem:[%s9 + $0x18] sm:$0xff]
    %v1619 = vld [vmem:[%s9 + $0x20] sm:$0xff]
    %v1620 = vld [vmem:[%s9 + $0x28] sm:$0xff]
    %v1621 = vld [vmem:[%s9 + $0x30] sm:$0xff]
    %v1622 = vld [vmem:[%s9 + $0x38] sm:$0xff]
    %v1623 = vld [vmem:[%s9 + $0x40] sm:$0xff]
    %v1624 = vld [vmem:[%s9 + $0x48] sm:$0xff]
    %v1625 = vld [vmem:[%s9 + $0x50] sm:$0xff]
    %v1626 = vld [vmem:[%s9 + $0x58] sm:$0xff]
    %v1627 = vld [vmem:[%s9 + $0x60] sm:$0xff]
    %v1628 = vld [vmem:[%s9 + $0x68] sm:$0xff]
    %v1629 = vld [vmem:[%s9 + $0x70] sm:$0xff]
    %v1630 = vld [vmem:[%s9 + $0x78] sm:$0xff]
    %1631 = vmatpush.msra.mxu0 %v1630
    %1632 = vmatpush.msra.mxu0 %v1629
    %1633 = vmatpush.msra.mxu0 %v1628
    %1634 = vmatpush.msra.mxu0 %v1627
    %1635 = vmatpush.msra.mxu0 %v1626
    %1636 = vmatpush.msra.mxu0 %v1625
    %1637 = vmatpush.msra.mxu0 %v1624
    %1638 = vmatpush.msra.mxu0 %v1623
    %1639 = vmatpush.msra.mxu0 %v1622
    %1640 = vmatpush.msra.mxu0 %v1621
    %1641 = vmatpush.msra.mxu0 %v1620
    %1642 = vmatpush.msra.mxu0 %v1619
    %1643 = vmatpush.msra.mxu0 %v1618
    %1644 = vmatpush.msra.mxu0 %v1617
    %1645 = vmatpush.msra.mxu0 %v1616
    %1646 = vmatpush.msra.mxu0 %v1615
    %1647 = vmatmul.f32.gmra.mxu0 %v1607
    %v1648 = vpop.f32.mrf.mxu0
    %v1649 = vadd.f32 0.0, %v1648
    %1650 = vmatmul.f32.gmra.mxu0 %v1608
    %v1651 = vpop.f32.mrf.mxu0
    %v1652 = vadd.f32 0.0, %v1651
    %1653 = vmatmul.f32.gmra.mxu0 %v1609
    %v1654 = vpop.f32.mrf.mxu0
    %v1655 = vadd.f32 0.0, %v1654
    %1656 = vmatmul.f32.gmra.mxu0 %v1610
    %v1657 = vpop.f32.mrf.mxu0
    %v1658 = vadd.f32 0.0, %v1657
    %1659 = vmatmul.f32.gmra.mxu0 %v1611
    %v1660 = vpop.f32.mrf.mxu0
    %v1661 = vadd.f32 0.0, %v1660
    %1662 = vmatmul.f32.gmra.mxu0 %v1612
    %v1663 = vpop.f32.mrf.mxu0
    %v1664 = vadd.f32 0.0, %v1663
    %1665 = vmatmul.f32.gmra.mxu0 %v1613
    %v1666 = vpop.f32.mrf.mxu0
    %v1667 = vadd.f32 0.0, %v1666
    %1668 = vmatmul.f32.gmra.mxu0 %v1614
    %v1669 = vpop.f32.mrf.mxu0
    %v1670 = vadd.f32 0.0, %v1669
    %1671 = vdwg.mxu0
    %v1672 = vtanh.pop %v1649
    %v1673 = vtanh.pop %v1652
    %v1674 = vtanh.pop %v1655
    %v1675 = vtanh.pop %v1658
    %v1676 = vtanh.pop %v1661
    %v1677 = vtanh.pop %v1664
    %v1678 = vtanh.pop %v1667
    %v1679 = vtanh.pop %v1670
    %v1680 = vld [vmem:[%s10] sm:$0x1]
    %v1682 = vperm.slane %v1680, 0
    %v1684 = vadd.f32 %v1672, %v1682
    %v1685 = vadd.f32 %v1673, %v1682
    %v1686 = vadd.f32 %v1674, %v1682
    %v1687 = vadd.f32 %v1675, %v1682
    %v1688 = vadd.f32 %v1676, %v1682
    %v1689 = vadd.f32 %v1677, %v1682
    %v1690 = vadd.f32 %v1678, %v1682
    %v1691 = vadd.f32 %v1679, %v1682
    %v1692 = vtanh.pop %v1684
    %v1693 = vtanh.pop %v1685
    %v1694 = vtanh.pop %v1686
    %v1695 = vtanh.pop %v1687
    %v1696 = vtanh.pop %v1688
    %v1697 = vtanh.pop %v1689
    %v1698 = vtanh.pop %v1690
    %v1699 = vtanh.pop %v1691
    %v1700 = vld [vmem:[#allocation12] sm:$0xff]
    %v1701 = vld [vmem:[#allocation12 + $0x8] sm:$0xff]
    %v1702 = vld [vmem:[#allocation12 + $0x10] sm:$0xff]
    %v1703 = vld [vmem:[#allocation12 + $0x18] sm:$0xff]
    %v1704 = vld [vmem:[#allocation12 + $0x20] sm:$0xff]
    %v1705 = vld [vmem:[#allocation12 + $0x28] sm:$0xff]
    %v1706 = vld [vmem:[#allocation12 + $0x30] sm:$0xff]
    %v1707 = vld [vmem:[#allocation12 + $0x38] sm:$0xff]
    %v1708 = vld [vmem:[#allocation12 + $0x40] sm:$0xff]
    %v1709 = vld [vmem:[#allocation12 + $0x48] sm:$0xff]
    %v1710 = vld [vmem:[#allocation12 + $0x50] sm:$0xff]
    %v1711 = vld [vmem:[#allocation12 + $0x58] sm:$0xff]
    %v1712 = vld [vmem:[#allocation12 + $0x60] sm:$0xff]
    %v1713 = vld [vmem:[#allocation12 + $0x68] sm:$0xff]
    %v1714 = vld [vmem:[#allocation12 + $0x70] sm:$0xff]
    %v1715 = vld [vmem:[#allocation12 + $0x78] sm:$0xff]
    %v1716 = vld [vmem:[%s12] sm:$0x1]
    %v1718 = vperm.slane %v1716, 0
    %1720 = vmatpush.msra.mxu0 %v1715
    %1721 = vmatpush.msra.mxu0 %v1714
    %1722 = vmatpush.msra.mxu0 %v1713
    %1723 = vmatpush.msra.mxu0 %v1712
    %1724 = vmatpush.msra.mxu0 %v1711
    %1725 = vmatpush.msra.mxu0 %v1710
    %1726 = vmatpush.msra.mxu0 %v1709
    %1727 = vmatpush.msra.mxu0 %v1708
    %1728 = vmatpush.msra.mxu0 %v1707
    %1729 = vmatpush.msra.mxu0 %v1706
    %1730 = vmatpush.msra.mxu0 %v1705
    %1731 = vmatpush.msra.mxu0 %v1704
    %1732 = vmatpush.msra.mxu0 %v1703
    %1733 = vmatpush.msra.mxu0 %v1702
    %1734 = vmatpush.msra.mxu0 %v1701
    %1735 = vmatpush.msra.mxu0 %v1700
    %1736 = vmatmul.f32.gmra.mxu0 %v1692
    %v1737 = vpop.f32.mrf.mxu0
    %v1738 = vadd.f32 %v1718, %v1737
    %1739 = vmatmul.f32.gmra.mxu0 %v1693
    %v1740 = vpop.f32.mrf.mxu0
    %v1741 = vadd.f32 %v1718, %v1740
    %1742 = vmatmul.f32.gmra.mxu0 %v1694
    %v1743 = vpop.f32.mrf.mxu0
    %v1744 = vadd.f32 %v1718, %v1743
    %1745 = vmatmul.f32.gmra.mxu0 %v1695
    %v1746 = vpop.f32.mrf.mxu0
    %v1747 = vadd.f32 %v1718, %v1746
    %1748 = vmatmul.f32.gmra.mxu0 %v1696
    %v1749 = vpop.f32.mrf.mxu0
    %v1750 = vadd.f32 %v1718, %v1749
    %1751 = vmatmul.f32.gmra.mxu0 %v1697
    %v1752 = vpop.f32.mrf.mxu0
    %v1753 = vadd.f32 %v1718, %v1752
    %1754 = vmatmul.f32.gmra.mxu0 %v1698
    %v1755 = vpop.f32.mrf.mxu0
    %v1756 = vadd.f32 %v1718, %v1755
    %1757 = vmatmul.f32.gmra.mxu0 %v1699
    %v1758 = vpop.f32.mrf.mxu0
    %v1759 = vadd.f32 %v1718, %v1758
    %1760 = vdwg.mxu0
    %v1761 = vtanh.pop %v1738
    %v1762 = vtanh.pop %v1741
    %v1763 = vtanh.pop %v1744
    %v1764 = vtanh.pop %v1747
    %v1765 = vtanh.pop %v1750
    %v1766 = vtanh.pop %v1753
    %v1767 = vtanh.pop %v1756
    %v1768 = vtanh.pop %v1759
    %v1769 = vld [vmem:[%s13] sm:$0x1]
    %v1771 = vperm.slane %v1769, 0
    %v1773 = vadd.f32 %v1761, %v1771
    %v1774 = vadd.f32 %v1762, %v1771
    %v1775 = vadd.f32 %v1763, %v1771
    %v1776 = vadd.f32 %v1764, %v1771
    %v1777 = vadd.f32 %v1765, %v1771
    %v1778 = vadd.f32 %v1766, %v1771
    %v1779 = vadd.f32 %v1767, %v1771
    %v1780 = vadd.f32 %v1768, %v1771
    %1781 = vst [vmem:[#allocation13] sm:$0xff] %v1773
    %1782 = vst [vmem:[#allocation13 + $0x8] sm:$0xff] %v1774
    %1783 = vst [vmem:[#allocation13 + $0x10] sm:$0xff] %v1775
    %1784 = vst [vmem:[#allocation13 + $0x18] sm:$0xff] %v1776
    %1785 = vst [vmem:[#allocation13 + $0x20] sm:$0xff] %v1777
    %1786 = vst [vmem:[#allocation13 + $0x28] sm:$0xff] %v1778
    %1787 = vst [vmem:[#allocation13 + $0x30] sm:$0xff] %v1779
    %1788 = vst [vmem:[#allocation13 + $0x38] sm:$0xff] %v1780
    // Predicated region
    $region78: #{tpu_custom_call.1} parent=1 // pred_check
      _
    $region79: #{tpu_custom_call.1} parent=1 // pred_check_branch
      %1790 = sbr.rel (0) target = $region81
    $region80: #{tpu_custom_call.1} parent=1 // pred_region
      %1792 = vsyncadd [#allocation6], 0
      %s1793 = sshll.u32 [#allocation13], 4
      %s1794 = int_to_ptr.vmem [resolvable:$true] %s1793
      %s1795 = sshll.u32 %s14, 4
      %s1796 = int_to_ptr.hbm [resolvable:$true] %s1795
      %1801 = dma.vmem_to_hbm [thread:$0]  %s1794, 1024, %s1796, [#allocation6], 128, 128, 8
    $region81: #{tpu_custom_call.1} parent=1 // pred_fallthru
      _
    // Predicated region
    $region82: #{tpu_custom_call.1} parent=1 // pred_check
      _
    $region83: #{tpu_custom_call.1} parent=1 // pred_check_branch
      %1803 = sbr.rel (0) target = $region85
    $region84: #{tpu_custom_call.1} parent=1 // pred_region
      %1805 = dma.done [#allocation6], 1024
    $region85: #{tpu_custom_call.1} parent=1 // pred_fallthru
      _
    %1806 = vsyncpa [#allocation5], 1
    %1807 = vsyncpa [#allocation8], 1
    %1808 = vsyncpa [#allocation11], 1
    %1809 = vsyncpa [#allocation6], 1

</llo_original>
